<compile_context>
chip_gen: v7x
topology: tpu7x:2x2x1
jax: 0.10.0
libtpu: 0.0.40
codegen_flags: <defaults>
</compile_context>

<pallas_src>
import numpy as np
import jax
import jax.numpy as jnp
from jax import lax
from jax.experimental import pallas as pl
from jax.experimental.pallas import tpu as pltpu

K1D = 3                 # ECA Conv1d kernel size
KSP = 7                 # spatial Conv2d kernel size
PAD = (KSP - 1) // 2    # = 3


def _make_kernel(C, H, W):
    HW = H * W
    P2 = PAD * W + PAD          # flat zero-halo width (covers the vertical pad)

    def kernel(x_ref, wcm_ref, w1d_ref, shift_ref, o_ref, ypad_ref, fpad_ref):
        # x_ref:     (1, C, HW)        VMEM  one batch element, lane-dense
        # wcm_ref:   (49, 2, HW)       VMEM  weight * column-mask slabs (BN folded)
        # w1d_ref:   (3,)              SMEM  ECA conv1d taps
        # shift_ref: (1,)              SMEM  folded BN shift
        # o_ref:     (1, C, HW)        VMEM  output
        # ypad_ref:  (C+2, 1)          VMEM  scratch: zero-padded pooled vector
        # fpad_ref:  (2, HW + 2*P2)    VMEM  scratch: zero-padded flat [sum_c ; max_c]
        x2 = x_ref[0].astype(jnp.float32)                     # (C, HW)

        # ---------------- channel (ECA) attention ----------------
        y = (jnp.sum(x2, axis=1, keepdims=True) * (1.0 / HW)
             + jnp.max(x2, axis=1, keepdims=True))            # (C, 1) avg+max pool
        zero1 = jnp.zeros((1, 1), jnp.float32)
        ypad_ref[0:1, :] = zero1
        ypad_ref[C + 1:C + 2, :] = zero1
        ypad_ref[1:C + 1, :] = y
        conv_c = (w1d_ref[0] * ypad_ref[0:C, :]               # 3-tap conv over C
                  + w1d_ref[1] * ypad_ref[1:C + 1, :]
                  + w1d_ref[2] * ypad_ref[2:C + 2, :])
        ch = jax.nn.sigmoid(conv_c)                           # (C, 1)
        x_att = x2 * ch                                       # (C, HW) lane-dense

        # ---------------- spatial attention (7x7 conv, flat layout) ----------------
        sp_sum = jnp.sum(x_att, axis=0, keepdims=True)        # (1, HW); 1/C folded in wcm
        sp_max = jnp.max(x_att, axis=0, keepdims=True)        # (1, HW)

        # Zero only the small halo every step (interior fully overwritten below).
        halo = jnp.zeros((2, P2), jnp.float32)
        fpad_ref[:, 0:P2] = halo
        fpad_ref[:, P2 + HW:P2 + HW + P2] = halo
        fpad_ref[0:1, P2:P2 + HW] = sp_sum
        fpad_ref[1:2, P2:P2 + HW] = sp_max
        fp = fpad_ref[...]                                    # (2, HW + 2*P2)

        # out[p] = sum_{dy,dx,c} w[c,dy,dx] * sp_c[p + (dy-3)*W + (dx-3)]
        # vertical out-of-range lands in the flat zero halo; horizontal
        # out-of-range is killed by the column mask folded into wcm.
        acc = jnp.zeros((2, HW), jnp.float32)
        for dy in range(KSP):
            for dx in range(KSP):
                k = dy * KSP + dx
                start = dy * W + dx                           # = P2 + (dy-PAD)*W + (dx-PAD)
                acc = acc + fp[:, start:start + HW] * wcm_ref[k]
        conv_s = acc[0:1, :] + acc[1:2, :] + shift_ref[0]     # (1, HW)
        spat = jax.nn.sigmoid(conv_s)

        o_ref[0] = (x_att * spat).astype(o_ref.dtype)         # lane-dense store

    return kernel


def advanced_eca_attention(x, conv1d_w, conv2d_w, bn_gamma, bn_beta, bn_mean,
                           bn_var, eps=1e-5):
    B, C, H, W = x.shape
    HW = H * W
    P2 = PAD * W + PAD

    x_flat = x.reshape(B, C, HW)                              # free, contiguous

    w1d = conv1d_w.reshape(K1D).astype(jnp.float32)

    # Fold eval-mode BatchNorm2d(1) into the 7x7 conv (scale) + shift; fold the
    # 1/C of the channel-mean into the "mean" input channel's weights.
    scale = bn_gamma / jnp.sqrt(bn_var + eps)
    shift = bn_beta - bn_mean * scale
    w2f = conv2d_w.reshape(2, KSP, KSP).astype(jnp.float32) * scale
    w2f = w2f * jnp.array([1.0 / C, 1.0], jnp.float32)[:, None, None]

    # Lane-dense weight * column-mask slabs:
    # wcm[dy*7+dx, c, p] = w2f[c, dy, dx] * [0 <= (p % W) + dx - PAD < W]
    col = jnp.arange(HW, dtype=jnp.int32) % W
    dxs = jnp.arange(KSP, dtype=jnp.int32) - PAD
    shifted = col[None, :] + dxs[:, None]                     # (7, HW)
    cmask = ((shifted >= 0) & (shifted < W)).astype(jnp.float32)
    wcm = jnp.einsum('cyx,xp->yxcp', w2f, cmask).reshape(KSP * KSP, 2, HW)

    shift_arr = jnp.reshape(shift, (1,)).astype(jnp.float32)

    # Explicit VMEM budget (covers v5e's 16 MiB scoped default, stays under
    # v7x's 64 MiB physical): double-buffered in/out blocks + constants + scratch.
    def _up(v, m):
        return ((v + m - 1) // m) * m
    blk_bytes = _up(C, 8) * _up(HW, 128) * x.dtype.itemsize
    wcm_bytes = KSP * KSP * 8 * _up(HW, 128) * 4
    scr_bytes = 8 * _up(HW + 2 * P2, 128) * 4 + 8 * 128 * 4
    vmem_limit = int(min(64 * 1024 * 1024,
                         max(16 * 1024 * 1024,
                             4 * blk_bytes + 2 * wcm_bytes + scr_bytes + (2 << 20))))

    out_flat = pl.pallas_call(
        _make_kernel(C, H, W),
        out_shape=jax.ShapeDtypeStruct((B, C, HW), x.dtype),
        grid=(B,),
        in_specs=[
            pl.BlockSpec((1, C, HW), lambda b: (b, 0, 0)),
            pl.BlockSpec((KSP * KSP, 2, HW), lambda b: (0, 0, 0)),
            pl.BlockSpec(memory_space=pltpu.MemorySpace.SMEM),
            pl.BlockSpec(memory_space=pltpu.MemorySpace.SMEM),
        ],
        out_specs=pl.BlockSpec((1, C, HW), lambda b: (b, 0, 0)),
        scratch_shapes=[pltpu.VMEM((C + 2, 1), jnp.float32),
                        pltpu.VMEM((2, HW + 2 * P2), jnp.float32)],
        compiler_params=pltpu.CompilerParams(
            dimension_semantics=("parallel",),   # B>=2 feeds both v7x TensorCores
            vmem_limit_bytes=vmem_limit),
    )(x_flat, wcm, w1d, shift_arr)
    return out_flat.reshape(B, C, H, W)


def reference(x, conv1d_w, conv2d_w, bn_gamma, bn_beta, bn_mean, bn_var, eps=1e-5):
    # Pure-JAX reference mirroring the PyTorch forward (eval-mode BN).
    B, C, H, W = x.shape
    y = jnp.mean(x, axis=(2, 3), keepdims=True) + jnp.max(x, axis=(2, 3), keepdims=True)
    seq = y[:, :, 0, 0]                                            # (B, C)
    w = conv1d_w.reshape(K1D)
    padded = jnp.pad(seq, ((0, 0), (1, 1)))
    conv = w[0] * padded[:, 0:C] + w[1] * padded[:, 1:C + 1] + w[2] * padded[:, 2:C + 2]
    ch = jax.nn.sigmoid(conv)[:, :, None, None]
    x_att = x * ch
    sp = jnp.concatenate([jnp.mean(x_att, axis=1, keepdims=True),
                          jnp.max(x_att, axis=1, keepdims=True)], axis=1)
    conv2 = lax.conv_general_dilated(sp, conv2d_w, (1, 1), ((PAD, PAD), (PAD, PAD)),
                                     dimension_numbers=('NCHW', 'OIHW', 'NCHW'))
    scale = bn_gamma / jnp.sqrt(bn_var + eps)
    shift = bn_beta - bn_mean * scale
    spat = jax.nn.sigmoid(conv2 * scale + shift)
    return x_att * spat


if __name__ == "__main__":
    key = jax.random.PRNGKey(0)
    kx, k1, k2 = jax.random.split(key, 3)
    B, C, H, W = 2, 16, 16, 16
    x = jax.random.normal(kx, (B, C, H, W), jnp.float32)

    # Deterministic synthetic parameters (shapes from AdvancedECAAttention.__init__).
    conv1d_w = jax.random.normal(k1, (1, 1, K1D), jnp.float32) * 0.5       # Conv1d(1,1,3)
    conv2d_w = jax.random.normal(k2, (1, 2, KSP, KSP), jnp.float32) * 0.1  # Conv2d(2,1,7)
    bn_gamma = jnp.float32(1.0)   # BatchNorm2d(1) default init, eval mode
    bn_beta = jnp.float32(0.0)
    bn_mean = jnp.float32(0.0)
    bn_var = jnp.float32(1.0)

    out = advanced_eca_attention(x, conv1d_w, conv2d_w, bn_gamma, bn_beta,
                                 bn_mean, bn_var)
    out = jax.block_until_ready(out)

    ref = reference(x, conv1d_w, conv2d_w, bn_gamma, bn_beta, bn_mean, bn_var)
    np.testing.assert_allclose(np.asarray(out), np.asarray(ref), rtol=2e-4, atol=2e-5)
    print("KERNEL_OK")
</pallas_src>

<mosaic_0001>
module attributes {stable_mosaic.version = 11 : i64} {
  func.func @kernel(%arg0: i32, %arg1: memref<1x16x256xf32, #tpu.memory_space<vmem>>, %arg2: memref<49x2x256xf32, #tpu.memory_space<vmem>>, %arg3: memref<3xf32, #tpu.memory_space<smem>>, %arg4: memref<1xf32, #tpu.memory_space<smem>>, %arg5: memref<1x16x256xf32, #tpu.memory_space<vmem>>, %arg6: memref<18x1xf32, #tpu.memory_space<vmem>>, %arg7: memref<2x358xf32, #tpu.memory_space<vmem>>) attributes {dimension_semantics = [#tpu.dimension_semantics<parallel>], iteration_bounds = array<i64: 2>, scalar_prefetch = 0 : i64, scratch_operands = 2 : i64, tpu.core_type = #tpu.core_type<tc>, window_params = [{transform_indices = @transform_0, window_bounds = array<i64: 1, 16, 256>}, {pipeline_mode = #tpu.pipeline_mode<synchronous>, transform_indices = @transform_1, window_bounds = array<i64: 49, 2, 256>}, {transform_indices = @transform_2, window_bounds = array<i64: 3>}, {transform_indices = @transform_3, window_bounds = array<i64: 1>}, {transform_indices = @transform_4, window_bounds = array<i64: 1, 16, 256>}]} {
    %c0 = arith.constant 0 : index
    %c0_0 = arith.constant 0 : index
    %c0_1 = arith.constant 0 : index
    %0 = vector.load %arg1[%c0, %c0_0, %c0_1] : memref<1x16x256xf32, #tpu.memory_space<vmem>>, vector<1x16x256xf32>
    %1 = vector.shape_cast %0 : vector<1x16x256xf32> to vector<16x256xf32>
    %cst = arith.constant dense<0.000000e+00> : vector<16xf32>
    %2 = vector.multi_reduction <add>, %1, %cst [1] : vector<16x256xf32> to vector<16xf32>
    %3 = vector.shape_cast %2 : vector<16xf32> to vector<16x1xf32>
    %cst_2 = arith.constant 3.906250e-03 : f32
    %4 = vector.broadcast %cst_2 : f32 to vector<16x1xf32>
    %5 = arith.mulf %3, %4 : vector<16x1xf32>
    %cst_3 = arith.constant dense<0xFF800000> : vector<16xf32>
    %6 = vector.multi_reduction <maximumf>, %1, %cst_3 [1] : vector<16x256xf32> to vector<16xf32>
    %7 = vector.shape_cast %6 : vector<16xf32> to vector<16x1xf32>
    %8 = arith.addf %5, %7 : vector<16x1xf32>
    %cst_4 = arith.constant 0.000000e+00 : f32
    %9 = vector.broadcast %cst_4 : f32 to vector<1x1xf32>
    %c0_5 = arith.constant 0 : index
    %c0_6 = arith.constant 0 : index
    %10 = vector.load %arg6[%c0_5, %c0_6] : memref<18x1xf32, #tpu.memory_space<vmem>>, vector<1x1xf32>
    tpu.vector_store %arg6[%c0_5, %c0_6], %9 {strides = array<i32>} : memref<18x1xf32, #tpu.memory_space<vmem>>, vector<1x1xf32>,
    %c17 = arith.constant 17 : index
    %c0_7 = arith.constant 0 : index
    %11 = vector.load %arg6[%c17, %c0_7] : memref<18x1xf32, #tpu.memory_space<vmem>>, vector<1x1xf32>
    tpu.vector_store %arg6[%c17, %c0_7], %9 {strides = array<i32>} : memref<18x1xf32, #tpu.memory_space<vmem>>, vector<1x1xf32>,
    %c1 = arith.constant 1 : index
    %c0_8 = arith.constant 0 : index
    %12 = vector.load %arg6[%c1, %c0_8] : memref<18x1xf32, #tpu.memory_space<vmem>>, vector<16x1xf32>
    tpu.vector_store %arg6[%c1, %c0_8], %8 {strides = array<i32>} : memref<18x1xf32, #tpu.memory_space<vmem>>, vector<16x1xf32>,
    %c0_9 = arith.constant 0 : index
    %13 = memref.load %arg3[%c0_9] : memref<3xf32, #tpu.memory_space<smem>>
    %c0_10 = arith.constant 0 : index
    %c0_11 = arith.constant 0 : index
    %14 = vector.load %arg6[%c0_10, %c0_11] : memref<18x1xf32, #tpu.memory_space<vmem>>, vector<16x1xf32>
    %15 = vector.broadcast %13 : f32 to vector<16x1xf32>
    %16 = arith.mulf %15, %14 : vector<16x1xf32>
    %c1_12 = arith.constant 1 : index
    %17 = memref.load %arg3[%c1_12] : memref<3xf32, #tpu.memory_space<smem>>
    %c1_13 = arith.constant 1 : index
    %c0_14 = arith.constant 0 : index
    %18 = vector.load %arg6[%c1_13, %c0_14] : memref<18x1xf32, #tpu.memory_space<vmem>>, vector<16x1xf32>
    %19 = vector.broadcast %17 : f32 to vector<16x1xf32>
    %20 = arith.mulf %19, %18 : vector<16x1xf32>
    %21 = arith.addf %16, %20 : vector<16x1xf32>
    %c2 = arith.constant 2 : index
    %22 = memref.load %arg3[%c2] : memref<3xf32, #tpu.memory_space<smem>>
    %c2_15 = arith.constant 2 : index
    %c0_16 = arith.constant 0 : index
    %23 = vector.load %arg6[%c2_15, %c0_16] : memref<18x1xf32, #tpu.memory_space<vmem>>, vector<16x1xf32>
    %24 = vector.broadcast %22 : f32 to vector<16x1xf32>
    %25 = arith.mulf %24, %23 : vector<16x1xf32>
    %26 = arith.addf %21, %25 : vector<16x1xf32>
    %27 = arith.negf %26 : vector<16x1xf32>
    %28 = math.exp %27 : vector<16x1xf32>
    %cst_17 = arith.constant 1.000000e+00 : f32
    %29 = vector.broadcast %cst_17 : f32 to vector<16x1xf32>
    %30 = arith.addf %29, %28 : vector<16x1xf32>
    %31 = arith.divf %29, %30 : vector<16x1xf32>
    %32 = vector.broadcast %31 : vector<16x1xf32> to vector<16x256xf32>
    %33 = arith.mulf %1, %32 : vector<16x256xf32>
    %cst_18 = arith.constant dense<0.000000e+00> : vector<256xf32>
    %34 = vector.multi_reduction <add>, %33, %cst_18 [0] : vector<16x256xf32> to vector<256xf32>
    %35 = vector.shape_cast %34 : vector<256xf32> to vector<1x256xf32>
    %cst_19 = arith.constant dense<0xFF800000> : vector<256xf32>
    %36 = vector.multi_reduction <maximumf>, %33, %cst_19 [0] : vector<16x256xf32> to vector<256xf32>
    %37 = vector.shape_cast %36 : vector<256xf32> to vector<1x256xf32>
    %cst_20 = arith.constant 0.000000e+00 : f32
    %38 = vector.broadcast %cst_20 : f32 to vector<2x51xf32>
    %c0_21 = arith.constant 0 : index
    %c0_22 = arith.constant 0 : index
    %39 = vector.load %arg7[%c0_21, %c0_22] : memref<2x358xf32, #tpu.memory_space<vmem>>, vector<2x51xf32>
    tpu.vector_store %arg7[%c0_21, %c0_22], %38 {strides = array<i32>} : memref<2x358xf32, #tpu.memory_space<vmem>>, vector<2x51xf32>,
    %c0_23 = arith.constant 0 : index
    %c307 = arith.constant 307 : index
    %40 = vector.load %arg7[%c0_23, %c307] : memref<2x358xf32, #tpu.memory_space<vmem>>, vector<2x51xf32>
    tpu.vector_store %arg7[%c0_23, %c307], %38 {strides = array<i32>} : memref<2x358xf32, #tpu.memory_space<vmem>>, vector<2x51xf32>,
    %c0_24 = arith.constant 0 : index
    %c51 = arith.constant 51 : index
    %41 = vector.load %arg7[%c0_24, %c51] : memref<2x358xf32, #tpu.memory_space<vmem>>, vector<1x256xf32>
    tpu.vector_store %arg7[%c0_24, %c51], %35 {strides = array<i32>} : memref<2x358xf32, #tpu.memory_space<vmem>>, vector<1x256xf32>,
    %c1_25 = arith.constant 1 : index
    %c51_26 = arith.constant 51 : index
    %42 = vector.load %arg7[%c1_25, %c51_26] : memref<2x358xf32, #tpu.memory_space<vmem>>, vector<1x256xf32>
    tpu.vector_store %arg7[%c1_25, %c51_26], %37 {strides = array<i32>} : memref<2x358xf32, #tpu.memory_space<vmem>>, vector<1x256xf32>,
    %c0_27 = arith.constant 0 : index
    %c0_28 = arith.constant 0 : index
    %43 = vector.load %arg7[%c0_27, %c0_28] : memref<2x358xf32, #tpu.memory_space<vmem>>, vector<2x358xf32>
    %cst_29 = arith.constant 0.000000e+00 : f32
    %44 = vector.broadcast %cst_29 : f32 to vector<2x256xf32>
    %45 = vector.extract_strided_slice %43 {offsets = [0, 0], sizes = [2, 256], strides = [1, 1]} : vector<2x358xf32> to vector<2x256xf32>
    %c0_30 = arith.constant 0 : index
    %c0_31 = arith.constant 0 : index
    %c0_32 = arith.constant 0 : index
    %46 = vector.load %arg2[%c0_30, %c0_31, %c0_32] : memref<49x2x256xf32, #tpu.memory_space<vmem>>, vector<1x2x256xf32>
    %47 = vector.shape_cast %46 : vector<1x2x256xf32> to vector<2x256xf32>
    %48 = arith.mulf %45, %47 : vector<2x256xf32>
    %49 = arith.addf %44, %48 : vector<2x256xf32>
    %50 = vector.extract_strided_slice %43 {offsets = [0, 1], sizes = [2, 256], strides = [1, 1]} : vector<2x358xf32> to vector<2x256xf32>
    %c1_33 = arith.constant 1 : index
    %c0_34 = arith.constant 0 : index
    %c0_35 = arith.constant 0 : index
    %51 = vector.load %arg2[%c1_33, %c0_34, %c0_35] : memref<49x2x256xf32, #tpu.memory_space<vmem>>, vector<1x2x256xf32>
    %52 = vector.shape_cast %51 : vector<1x2x256xf32> to vector<2x256xf32>
    %53 = arith.mulf %50, %52 : vector<2x256xf32>
    %54 = arith.addf %49, %53 : vector<2x256xf32>
    %55 = vector.extract_strided_slice %43 {offsets = [0, 2], sizes = [2, 256], strides = [1, 1]} : vector<2x358xf32> to vector<2x256xf32>
    %c2_36 = arith.constant 2 : index
    %c0_37 = arith.constant 0 : index
    %c0_38 = arith.constant 0 : index
    %56 = vector.load %arg2[%c2_36, %c0_37, %c0_38] : memref<49x2x256xf32, #tpu.memory_space<vmem>>, vector<1x2x256xf32>
    %57 = vector.shape_cast %56 : vector<1x2x256xf32> to vector<2x256xf32>
    %58 = arith.mulf %55, %57 : vector<2x256xf32>
    %59 = arith.addf %54, %58 : vector<2x256xf32>
    %60 = vector.extract_strided_slice %43 {offsets = [0, 3], sizes = [2, 256], strides = [1, 1]} : vector<2x358xf32> to vector<2x256xf32>
    %c3 = arith.constant 3 : index
    %c0_39 = arith.constant 0 : index
    %c0_40 = arith.constant 0 : index
    %61 = vector.load %arg2[%c3, %c0_39, %c0_40] : memref<49x2x256xf32, #tpu.memory_space<vmem>>, vector<1x2x256xf32>
    %62 = vector.shape_cast %61 : vector<1x2x256xf32> to vector<2x256xf32>
    %63 = arith.mulf %60, %62 : vector<2x256xf32>
    %64 = arith.addf %59, %63 : vector<2x256xf32>
    %65 = vector.extract_strided_slice %43 {offsets = [0, 4], sizes = [2, 256], strides = [1, 1]} : vector<2x358xf32> to vector<2x256xf32>
    %c4 = arith.constant 4 : index
    %c0_41 = arith.constant 0 : index
    %c0_42 = arith.constant 0 : index
    %66 = vector.load %arg2[%c4, %c0_41, %c0_42] : memref<49x2x256xf32, #tpu.memory_space<vmem>>, vector<1x2x256xf32>
    %67 = vector.shape_cast %66 : vector<1x2x256xf32> to vector<2x256xf32>
    %68 = arith.mulf %65, %67 : vector<2x256xf32>
    %69 = arith.addf %64, %68 : vector<2x256xf32>
    %70 = vector.extract_strided_slice %43 {offsets = [0, 5], sizes = [2, 256], strides = [1, 1]} : vector<2x358xf32> to vector<2x256xf32>
    %c5 = arith.constant 5 : index
    %c0_43 = arith.constant 0 : index
    %c0_44 = arith.constant 0 : index
    %71 = vector.load %arg2[%c5, %c0_43, %c0_44] : memref<49x2x256xf32, #tpu.memory_space<vmem>>, vector<1x2x256xf32>
    %72 = vector.shape_cast %71 : vector<1x2x256xf32> to vector<2x256xf32>
    %73 = arith.mulf %70, %72 : vector<2x256xf32>
    %74 = arith.addf %69, %73 : vector<2x256xf32>
    %75 = vector.extract_strided_slice %43 {offsets = [0, 6], sizes = [2, 256], strides = [1, 1]} : vector<2x358xf32> to vector<2x256xf32>
    %c6 = arith.constant 6 : index
    %c0_45 = arith.constant 0 : index
    %c0_46 = arith.constant 0 : index
    %76 = vector.load %arg2[%c6, %c0_45, %c0_46] : memref<49x2x256xf32, #tpu.memory_space<vmem>>, vector<1x2x256xf32>
    %77 = vector.shape_cast %76 : vector<1x2x256xf32> to vector<2x256xf32>
    %78 = arith.mulf %75, %77 : vector<2x256xf32>
    %79 = arith.addf %74, %78 : vector<2x256xf32>
    %80 = vector.extract_strided_slice %43 {offsets = [0, 16], sizes = [2, 256], strides = [1, 1]} : vector<2x358xf32> to vector<2x256xf32>
    %c7 = arith.constant 7 : index
    %c0_47 = arith.constant 0 : index
    %c0_48 = arith.constant 0 : index
    %81 = vector.load %arg2[%c7, %c0_47, %c0_48] : memref<49x2x256xf32, #tpu.memory_space<vmem>>, vector<1x2x256xf32>
    %82 = vector.shape_cast %81 : vector<1x2x256xf32> to vector<2x256xf32>
    %83 = arith.mulf %80, %82 : vector<2x256xf32>
    %84 = arith.addf %79, %83 : vector<2x256xf32>
    %85 = vector.extract_strided_slice %43 {offsets = [0, 17], sizes = [2, 256], strides = [1, 1]} : vector<2x358xf32> to vector<2x256xf32>
    %c8 = arith.constant 8 : index
    %c0_49 = arith.constant 0 : index
    %c0_50 = arith.constant 0 : index
    %86 = vector.load %arg2[%c8, %c0_49, %c0_50] : memref<49x2x256xf32, #tpu.memory_space<vmem>>, vector<1x2x256xf32>
    %87 = vector.shape_cast %86 : vector<1x2x256xf32> to vector<2x256xf32>
    %88 = arith.mulf %85, %87 : vector<2x256xf32>
    %89 = arith.addf %84, %88 : vector<2x256xf32>
    %90 = vector.extract_strided_slice %43 {offsets = [0, 18], sizes = [2, 256], strides = [1, 1]} : vector<2x358xf32> to vector<2x256xf32>
    %c9 = arith.constant 9 : index
    %c0_51 = arith.constant 0 : index
    %c0_52 = arith.constant 0 : index
    %91 = vector.load %arg2[%c9, %c0_51, %c0_52] : memref<49x2x256xf32, #tpu.memory_space<vmem>>, vector<1x2x256xf32>
    %92 = vector.shape_cast %91 : vector<1x2x256xf32> to vector<2x256xf32>
    %93 = arith.mulf %90, %92 : vector<2x256xf32>
    %94 = arith.addf %89, %93 : vector<2x256xf32>
    %95 = vector.extract_strided_slice %43 {offsets = [0, 19], sizes = [2, 256], strides = [1, 1]} : vector<2x358xf32> to vector<2x256xf32>
    %c10 = arith.constant 10 : index
    %c0_53 = arith.constant 0 : index
    %c0_54 = arith.constant 0 : index
    %96 = vector.load %arg2[%c10, %c0_53, %c0_54] : memref<49x2x256xf32, #tpu.memory_space<vmem>>, vector<1x2x256xf32>
    %97 = vector.shape_cast %96 : vector<1x2x256xf32> to vector<2x256xf32>
    %98 = arith.mulf %95, %97 : vector<2x256xf32>
    %99 = arith.addf %94, %98 : vector<2x256xf32>
    %100 = vector.extract_strided_slice %43 {offsets = [0, 20], sizes = [2, 256], strides = [1, 1]} : vector<2x358xf32> to vector<2x256xf32>
    %c11 = arith.constant 11 : index
    %c0_55 = arith.constant 0 : index
    %c0_56 = arith.constant 0 : index
    %101 = vector.load %arg2[%c11, %c0_55, %c0_56] : memref<49x2x256xf32, #tpu.memory_space<vmem>>, vector<1x2x256xf32>
    %102 = vector.shape_cast %101 : vector<1x2x256xf32> to vector<2x256xf32>
    %103 = arith.mulf %100, %102 : vector<2x256xf32>
    %104 = arith.addf %99, %103 : vector<2x256xf32>
    %105 = vector.extract_strided_slice %43 {offsets = [0, 21], sizes = [2, 256], strides = [1, 1]} : vector<2x358xf32> to vector<2x256xf32>
    %c12 = arith.constant 12 : index
    %c0_57 = arith.constant 0 : index
    %c0_58 = arith.constant 0 : index
    %106 = vector.load %arg2[%c12, %c0_57, %c0_58] : memref<49x2x256xf32, #tpu.memory_space<vmem>>, vector<1x2x256xf32>
    %107 = vector.shape_cast %106 : vector<1x2x256xf32> to vector<2x256xf32>
    %108 = arith.mulf %105, %107 : vector<2x256xf32>
    %109 = arith.addf %104, %108 : vector<2x256xf32>
    %110 = vector.extract_strided_slice %43 {offsets = [0, 22], sizes = [2, 256], strides = [1, 1]} : vector<2x358xf32> to vector<2x256xf32>
    %c13 = arith.constant 13 : index
    %c0_59 = arith.constant 0 : index
    %c0_60 = arith.constant 0 : index
    %111 = vector.load %arg2[%c13, %c0_59, %c0_60] : memref<49x2x256xf32, #tpu.memory_space<vmem>>, vector<1x2x256xf32>
    %112 = vector.shape_cast %111 : vector<1x2x256xf32> to vector<2x256xf32>
    %113 = arith.mulf %110, %112 : vector<2x256xf32>
    %114 = arith.addf %109, %113 : vector<2x256xf32>
    %115 = vector.extract_strided_slice %43 {offsets = [0, 32], sizes = [2, 256], strides = [1, 1]} : vector<2x358xf32> to vector<2x256xf32>
    %c14 = arith.constant 14 : index
    %c0_61 = arith.constant 0 : index
    %c0_62 = arith.constant 0 : index
    %116 = vector.load %arg2[%c14, %c0_61, %c0_62] : memref<49x2x256xf32, #tpu.memory_space<vmem>>, vector<1x2x256xf32>
    %117 = vector.shape_cast %116 : vector<1x2x256xf32> to vector<2x256xf32>
    %118 = arith.mulf %115, %117 : vector<2x256xf32>
    %119 = arith.addf %114, %118 : vector<2x256xf32>
    %120 = vector.extract_strided_slice %43 {offsets = [0, 33], sizes = [2, 256], strides = [1, 1]} : vector<2x358xf32> to vector<2x256xf32>
    %c15 = arith.constant 15 : index
    %c0_63 = arith.constant 0 : index
    %c0_64 = arith.constant 0 : index
    %121 = vector.load %arg2[%c15, %c0_63, %c0_64] : memref<49x2x256xf32, #tpu.memory_space<vmem>>, vector<1x2x256xf32>
    %122 = vector.shape_cast %121 : vector<1x2x256xf32> to vector<2x256xf32>
    %123 = arith.mulf %120, %122 : vector<2x256xf32>
    %124 = arith.addf %119, %123 : vector<2x256xf32>
    %125 = vector.extract_strided_slice %43 {offsets = [0, 34], sizes = [2, 256], strides = [1, 1]} : vector<2x358xf32> to vector<2x256xf32>
    %c16 = arith.constant 16 : index
    %c0_65 = arith.constant 0 : index
    %c0_66 = arith.constant 0 : index
    %126 = vector.load %arg2[%c16, %c0_65, %c0_66] : memref<49x2x256xf32, #tpu.memory_space<vmem>>, vector<1x2x256xf32>
    %127 = vector.shape_cast %126 : vector<1x2x256xf32> to vector<2x256xf32>
    %128 = arith.mulf %125, %127 : vector<2x256xf32>
    %129 = arith.addf %124, %128 : vector<2x256xf32>
    %130 = vector.extract_strided_slice %43 {offsets = [0, 35], sizes = [2, 256], strides = [1, 1]} : vector<2x358xf32> to vector<2x256xf32>
    %c17_67 = arith.constant 17 : index
    %c0_68 = arith.constant 0 : index
    %c0_69 = arith.constant 0 : index
    %131 = vector.load %arg2[%c17_67, %c0_68, %c0_69] : memref<49x2x256xf32, #tpu.memory_space<vmem>>, vector<1x2x256xf32>
    %132 = vector.shape_cast %131 : vector<1x2x256xf32> to vector<2x256xf32>
    %133 = arith.mulf %130, %132 : vector<2x256xf32>
    %134 = arith.addf %129, %133 : vector<2x256xf32>
    %135 = vector.extract_strided_slice %43 {offsets = [0, 36], sizes = [2, 256], strides = [1, 1]} : vector<2x358xf32> to vector<2x256xf32>
    %c18 = arith.constant 18 : index
    %c0_70 = arith.constant 0 : index
    %c0_71 = arith.constant 0 : index
    %136 = vector.load %arg2[%c18, %c0_70, %c0_71] : memref<49x2x256xf32, #tpu.memory_space<vmem>>, vector<1x2x256xf32>
    %137 = vector.shape_cast %136 : vector<1x2x256xf32> to vector<2x256xf32>
    %138 = arith.mulf %135, %137 : vector<2x256xf32>
    %139 = arith.addf %134, %138 : vector<2x256xf32>
    %140 = vector.extract_strided_slice %43 {offsets = [0, 37], sizes = [2, 256], strides = [1, 1]} : vector<2x358xf32> to vector<2x256xf32>
    %c19 = arith.constant 19 : index
    %c0_72 = arith.constant 0 : index
    %c0_73 = arith.constant 0 : index
    %141 = vector.load %arg2[%c19, %c0_72, %c0_73] : memref<49x2x256xf32, #tpu.memory_space<vmem>>, vector<1x2x256xf32>
    %142 = vector.shape_cast %141 : vector<1x2x256xf32> to vector<2x256xf32>
    %143 = arith.mulf %140, %142 : vector<2x256xf32>
    %144 = arith.addf %139, %143 : vector<2x256xf32>
    %145 = vector.extract_strided_slice %43 {offsets = [0, 38], sizes = [2, 256], strides = [1, 1]} : vector<2x358xf32> to vector<2x256xf32>
    %c20 = arith.constant 20 : index
    %c0_74 = arith.constant 0 : index
    %c0_75 = arith.constant 0 : index
    %146 = vector.load %arg2[%c20, %c0_74, %c0_75] : memref<49x2x256xf32, #tpu.memory_space<vmem>>, vector<1x2x256xf32>
    %147 = vector.shape_cast %146 : vector<1x2x256xf32> to vector<2x256xf32>
    %148 = arith.mulf %145, %147 : vector<2x256xf32>
    %149 = arith.addf %144, %148 : vector<2x256xf32>
    %150 = vector.extract_strided_slice %43 {offsets = [0, 48], sizes = [2, 256], strides = [1, 1]} : vector<2x358xf32> to vector<2x256xf32>
    %c21 = arith.constant 21 : index
    %c0_76 = arith.constant 0 : index
    %c0_77 = arith.constant 0 : index
    %151 = vector.load %arg2[%c21, %c0_76, %c0_77] : memref<49x2x256xf32, #tpu.memory_space<vmem>>, vector<1x2x256xf32>
    %152 = vector.shape_cast %151 : vector<1x2x256xf32> to vector<2x256xf32>
    %153 = arith.mulf %150, %152 : vector<2x256xf32>
    %154 = arith.addf %149, %153 : vector<2x256xf32>
    %155 = vector.extract_strided_slice %43 {offsets = [0, 49], sizes = [2, 256], strides = [1, 1]} : vector<2x358xf32> to vector<2x256xf32>
    %c22 = arith.constant 22 : index
    %c0_78 = arith.constant 0 : index
    %c0_79 = arith.constant 0 : index
    %156 = vector.load %arg2[%c22, %c0_78, %c0_79] : memref<49x2x256xf32, #tpu.memory_space<vmem>>, vector<1x2x256xf32>
    %157 = vector.shape_cast %156 : vector<1x2x256xf32> to vector<2x256xf32>
    %158 = arith.mulf %155, %157 : vector<2x256xf32>
    %159 = arith.addf %154, %158 : vector<2x256xf32>
    %160 = vector.extract_strided_slice %43 {offsets = [0, 50], sizes = [2, 256], strides = [1, 1]} : vector<2x358xf32> to vector<2x256xf32>
    %c23 = arith.constant 23 : index
    %c0_80 = arith.constant 0 : index
    %c0_81 = arith.constant 0 : index
    %161 = vector.load %arg2[%c23, %c0_80, %c0_81] : memref<49x2x256xf32, #tpu.memory_space<vmem>>, vector<1x2x256xf32>
    %162 = vector.shape_cast %161 : vector<1x2x256xf32> to vector<2x256xf32>
    %163 = arith.mulf %160, %162 : vector<2x256xf32>
    %164 = arith.addf %159, %163 : vector<2x256xf32>
    %165 = vector.extract_strided_slice %43 {offsets = [0, 51], sizes = [2, 256], strides = [1, 1]} : vector<2x358xf32> to vector<2x256xf32>
    %c24 = arith.constant 24 : index
    %c0_82 = arith.constant 0 : index
    %c0_83 = arith.constant 0 : index
    %166 = vector.load %arg2[%c24, %c0_82, %c0_83] : memref<49x2x256xf32, #tpu.memory_space<vmem>>, vector<1x2x256xf32>
    %167 = vector.shape_cast %166 : vector<1x2x256xf32> to vector<2x256xf32>
    %168 = arith.mulf %165, %167 : vector<2x256xf32>
    %169 = arith.addf %164, %168 : vector<2x256xf32>
    %170 = vector.extract_strided_slice %43 {offsets = [0, 52], sizes = [2, 256], strides = [1, 1]} : vector<2x358xf32> to vector<2x256xf32>
    %c25 = arith.constant 25 : index
    %c0_84 = arith.constant 0 : index
    %c0_85 = arith.constant 0 : index
    %171 = vector.load %arg2[%c25, %c0_84, %c0_85] : memref<49x2x256xf32, #tpu.memory_space<vmem>>, vector<1x2x256xf32>
    %172 = vector.shape_cast %171 : vector<1x2x256xf32> to vector<2x256xf32>
    %173 = arith.mulf %170, %172 : vector<2x256xf32>
    %174 = arith.addf %169, %173 : vector<2x256xf32>
    %175 = vector.extract_strided_slice %43 {offsets = [0, 53], sizes = [2, 256], strides = [1, 1]} : vector<2x358xf32> to vector<2x256xf32>
    %c26 = arith.constant 26 : index
    %c0_86 = arith.constant 0 : index
    %c0_87 = arith.constant 0 : index
    %176 = vector.load %arg2[%c26, %c0_86, %c0_87] : memref<49x2x256xf32, #tpu.memory_space<vmem>>, vector<1x2x256xf32>
    %177 = vector.shape_cast %176 : vector<1x2x256xf32> to vector<2x256xf32>
    %178 = arith.mulf %175, %177 : vector<2x256xf32>
    %179 = arith.addf %174, %178 : vector<2x256xf32>
    %180 = vector.extract_strided_slice %43 {offsets = [0, 54], sizes = [2, 256], strides = [1, 1]} : vector<2x358xf32> to vector<2x256xf32>
    %c27 = arith.constant 27 : index
    %c0_88 = arith.constant 0 : index
    %c0_89 = arith.constant 0 : index
    %181 = vector.load %arg2[%c27, %c0_88, %c0_89] : memref<49x2x256xf32, #tpu.memory_space<vmem>>, vector<1x2x256xf32>
    %182 = vector.shape_cast %181 : vector<1x2x256xf32> to vector<2x256xf32>
    %183 = arith.mulf %180, %182 : vector<2x256xf32>
    %184 = arith.addf %179, %183 : vector<2x256xf32>
    %185 = vector.extract_strided_slice %43 {offsets = [0, 64], sizes = [2, 256], strides = [1, 1]} : vector<2x358xf32> to vector<2x256xf32>
    %c28 = arith.constant 28 : index
    %c0_90 = arith.constant 0 : index
    %c0_91 = arith.constant 0 : index
    %186 = vector.load %arg2[%c28, %c0_90, %c0_91] : memref<49x2x256xf32, #tpu.memory_space<vmem>>, vector<1x2x256xf32>
    %187 = vector.shape_cast %186 : vector<1x2x256xf32> to vector<2x256xf32>
    %188 = arith.mulf %185, %187 : vector<2x256xf32>
    %189 = arith.addf %184, %188 : vector<2x256xf32>
    %190 = vector.extract_strided_slice %43 {offsets = [0, 65], sizes = [2, 256], strides = [1, 1]} : vector<2x358xf32> to vector<2x256xf32>
    %c29 = arith.constant 29 : index
    %c0_92 = arith.constant 0 : index
    %c0_93 = arith.constant 0 : index
    %191 = vector.load %arg2[%c29, %c0_92, %c0_93] : memref<49x2x256xf32, #tpu.memory_space<vmem>>, vector<1x2x256xf32>
    %192 = vector.shape_cast %191 : vector<1x2x256xf32> to vector<2x256xf32>
    %193 = arith.mulf %190, %192 : vector<2x256xf32>
    %194 = arith.addf %189, %193 : vector<2x256xf32>
    %195 = vector.extract_strided_slice %43 {offsets = [0, 66], sizes = [2, 256], strides = [1, 1]} : vector<2x358xf32> to vector<2x256xf32>
    %c30 = arith.constant 30 : index
    %c0_94 = arith.constant 0 : index
    %c0_95 = arith.constant 0 : index
    %196 = vector.load %arg2[%c30, %c0_94, %c0_95] : memref<49x2x256xf32, #tpu.memory_space<vmem>>, vector<1x2x256xf32>
    %197 = vector.shape_cast %196 : vector<1x2x256xf32> to vector<2x256xf32>
    %198 = arith.mulf %195, %197 : vector<2x256xf32>
    %199 = arith.addf %194, %198 : vector<2x256xf32>
    %200 = vector.extract_strided_slice %43 {offsets = [0, 67], sizes = [2, 256], strides = [1, 1]} : vector<2x358xf32> to vector<2x256xf32>
    %c31 = arith.constant 31 : index
    %c0_96 = arith.constant 0 : index
    %c0_97 = arith.constant 0 : index
    %201 = vector.load %arg2[%c31, %c0_96, %c0_97] : memref<49x2x256xf32, #tpu.memory_space<vmem>>, vector<1x2x256xf32>
    %202 = vector.shape_cast %201 : vector<1x2x256xf32> to vector<2x256xf32>
    %203 = arith.mulf %200, %202 : vector<2x256xf32>
    %204 = arith.addf %199, %203 : vector<2x256xf32>
    %205 = vector.extract_strided_slice %43 {offsets = [0, 68], sizes = [2, 256], strides = [1, 1]} : vector<2x358xf32> to vector<2x256xf32>
    %c32 = arith.constant 32 : index
    %c0_98 = arith.constant 0 : index
    %c0_99 = arith.constant 0 : index
    %206 = vector.load %arg2[%c32, %c0_98, %c0_99] : memref<49x2x256xf32, #tpu.memory_space<vmem>>, vector<1x2x256xf32>
    %207 = vector.shape_cast %206 : vector<1x2x256xf32> to vector<2x256xf32>
    %208 = arith.mulf %205, %207 : vector<2x256xf32>
    %209 = arith.addf %204, %208 : vector<2x256xf32>
    %210 = vector.extract_strided_slice %43 {offsets = [0, 69], sizes = [2, 256], strides = [1, 1]} : vector<2x358xf32> to vector<2x256xf32>
    %c33 = arith.constant 33 : index
    %c0_100 = arith.constant 0 : index
    %c0_101 = arith.constant 0 : index
    %211 = vector.load %arg2[%c33, %c0_100, %c0_101] : memref<49x2x256xf32, #tpu.memory_space<vmem>>, vector<1x2x256xf32>
    %212 = vector.shape_cast %211 : vector<1x2x256xf32> to vector<2x256xf32>
    %213 = arith.mulf %210, %212 : vector<2x256xf32>
    %214 = arith.addf %209, %213 : vector<2x256xf32>
    %215 = vector.extract_strided_slice %43 {offsets = [0, 70], sizes = [2, 256], strides = [1, 1]} : vector<2x358xf32> to vector<2x256xf32>
    %c34 = arith.constant 34 : index
    %c0_102 = arith.constant 0 : index
    %c0_103 = arith.constant 0 : index
    %216 = vector.load %arg2[%c34, %c0_102, %c0_103] : memref<49x2x256xf32, #tpu.memory_space<vmem>>, vector<1x2x256xf32>
    %217 = vector.shape_cast %216 : vector<1x2x256xf32> to vector<2x256xf32>
    %218 = arith.mulf %215, %217 : vector<2x256xf32>
    %219 = arith.addf %214, %218 : vector<2x256xf32>
    %220 = vector.extract_strided_slice %43 {offsets = [0, 80], sizes = [2, 256], strides = [1, 1]} : vector<2x358xf32> to vector<2x256xf32>
    %c35 = arith.constant 35 : index
    %c0_104 = arith.constant 0 : index
    %c0_105 = arith.constant 0 : index
    %221 = vector.load %arg2[%c35, %c0_104, %c0_105] : memref<49x2x256xf32, #tpu.memory_space<vmem>>, vector<1x2x256xf32>
    %222 = vector.shape_cast %221 : vector<1x2x256xf32> to vector<2x256xf32>
    %223 = arith.mulf %220, %222 : vector<2x256xf32>
    %224 = arith.addf %219, %223 : vector<2x256xf32>
    %225 = vector.extract_strided_slice %43 {offsets = [0, 81], sizes = [2, 256], strides = [1, 1]} : vector<2x358xf32> to vector<2x256xf32>
    %c36 = arith.constant 36 : index
    %c0_106 = arith.constant 0 : index
    %c0_107 = arith.constant 0 : index
    %226 = vector.load %arg2[%c36, %c0_106, %c0_107] : memref<49x2x256xf32, #tpu.memory_space<vmem>>, vector<1x2x256xf32>
    %227 = vector.shape_cast %226 : vector<1x2x256xf32> to vector<2x256xf32>
    %228 = arith.mulf %225, %227 : vector<2x256xf32>
    %229 = arith.addf %224, %228 : vector<2x256xf32>
    %230 = vector.extract_strided_slice %43 {offsets = [0, 82], sizes = [2, 256], strides = [1, 1]} : vector<2x358xf32> to vector<2x256xf32>
    %c37 = arith.constant 37 : index
    %c0_108 = arith.constant 0 : index
    %c0_109 = arith.constant 0 : index
    %231 = vector.load %arg2[%c37, %c0_108, %c0_109] : memref<49x2x256xf32, #tpu.memory_space<vmem>>, vector<1x2x256xf32>
    %232 = vector.shape_cast %231 : vector<1x2x256xf32> to vector<2x256xf32>
    %233 = arith.mulf %230, %232 : vector<2x256xf32>
    %234 = arith.addf %229, %233 : vector<2x256xf32>
    %235 = vector.extract_strided_slice %43 {offsets = [0, 83], sizes = [2, 256], strides = [1, 1]} : vector<2x358xf32> to vector<2x256xf32>
    %c38 = arith.constant 38 : index
    %c0_110 = arith.constant 0 : index
    %c0_111 = arith.constant 0 : index
    %236 = vector.load %arg2[%c38, %c0_110, %c0_111] : memref<49x2x256xf32, #tpu.memory_space<vmem>>, vector<1x2x256xf32>
    %237 = vector.shape_cast %236 : vector<1x2x256xf32> to vector<2x256xf32>
    %238 = arith.mulf %235, %237 : vector<2x256xf32>
    %239 = arith.addf %234, %238 : vector<2x256xf32>
    %240 = vector.extract_strided_slice %43 {offsets = [0, 84], sizes = [2, 256], strides = [1, 1]} : vector<2x358xf32> to vector<2x256xf32>
    %c39 = arith.constant 39 : index
    %c0_112 = arith.constant 0 : index
    %c0_113 = arith.constant 0 : index
    %241 = vector.load %arg2[%c39, %c0_112, %c0_113] : memref<49x2x256xf32, #tpu.memory_space<vmem>>, vector<1x2x256xf32>
    %242 = vector.shape_cast %241 : vector<1x2x256xf32> to vector<2x256xf32>
    %243 = arith.mulf %240, %242 : vector<2x256xf32>
    %244 = arith.addf %239, %243 : vector<2x256xf32>
    %245 = vector.extract_strided_slice %43 {offsets = [0, 85], sizes = [2, 256], strides = [1, 1]} : vector<2x358xf32> to vector<2x256xf32>
    %c40 = arith.constant 40 : index
    %c0_114 = arith.constant 0 : index
    %c0_115 = arith.constant 0 : index
    %246 = vector.load %arg2[%c40, %c0_114, %c0_115] : memref<49x2x256xf32, #tpu.memory_space<vmem>>, vector<1x2x256xf32>
    %247 = vector.shape_cast %246 : vector<1x2x256xf32> to vector<2x256xf32>
    %248 = arith.mulf %245, %247 : vector<2x256xf32>
    %249 = arith.addf %244, %248 : vector<2x256xf32>
    %250 = vector.extract_strided_slice %43 {offsets = [0, 86], sizes = [2, 256], strides = [1, 1]} : vector<2x358xf32> to vector<2x256xf32>
    %c41 = arith.constant 41 : index
    %c0_116 = arith.constant 0 : index
    %c0_117 = arith.constant 0 : index
    %251 = vector.load %arg2[%c41, %c0_116, %c0_117] : memref<49x2x256xf32, #tpu.memory_space<vmem>>, vector<1x2x256xf32>
    %252 = vector.shape_cast %251 : vector<1x2x256xf32> to vector<2x256xf32>
    %253 = arith.mulf %250, %252 : vector<2x256xf32>
    %254 = arith.addf %249, %253 : vector<2x256xf32>
    %255 = vector.extract_strided_slice %43 {offsets = [0, 96], sizes = [2, 256], strides = [1, 1]} : vector<2x358xf32> to vector<2x256xf32>
    %c42 = arith.constant 42 : index
    %c0_118 = arith.constant 0 : index
    %c0_119 = arith.constant 0 : index
    %256 = vector.load %arg2[%c42, %c0_118, %c0_119] : memref<49x2x256xf32, #tpu.memory_space<vmem>>, vector<1x2x256xf32>
    %257 = vector.shape_cast %256 : vector<1x2x256xf32> to vector<2x256xf32>
    %258 = arith.mulf %255, %257 : vector<2x256xf32>
    %259 = arith.addf %254, %258 : vector<2x256xf32>
    %260 = vector.extract_strided_slice %43 {offsets = [0, 97], sizes = [2, 256], strides = [1, 1]} : vector<2x358xf32> to vector<2x256xf32>
    %c43 = arith.constant 43 : index
    %c0_120 = arith.constant 0 : index
    %c0_121 = arith.constant 0 : index
    %261 = vector.load %arg2[%c43, %c0_120, %c0_121] : memref<49x2x256xf32, #tpu.memory_space<vmem>>, vector<1x2x256xf32>
    %262 = vector.shape_cast %261 : vector<1x2x256xf32> to vector<2x256xf32>
    %263 = arith.mulf %260, %262 : vector<2x256xf32>
    %264 = arith.addf %259, %263 : vector<2x256xf32>
    %265 = vector.extract_strided_slice %43 {offsets = [0, 98], sizes = [2, 256], strides = [1, 1]} : vector<2x358xf32> to vector<2x256xf32>
    %c44 = arith.constant 44 : index
    %c0_122 = arith.constant 0 : index
    %c0_123 = arith.constant 0 : index
    %266 = vector.load %arg2[%c44, %c0_122, %c0_123] : memref<49x2x256xf32, #tpu.memory_space<vmem>>, vector<1x2x256xf32>
    %267 = vector.shape_cast %266 : vector<1x2x256xf32> to vector<2x256xf32>
    %268 = arith.mulf %265, %267 : vector<2x256xf32>
    %269 = arith.addf %264, %268 : vector<2x256xf32>
    %270 = vector.extract_strided_slice %43 {offsets = [0, 99], sizes = [2, 256], strides = [1, 1]} : vector<2x358xf32> to vector<2x256xf32>
    %c45 = arith.constant 45 : index
    %c0_124 = arith.constant 0 : index
    %c0_125 = arith.constant 0 : index
    %271 = vector.load %arg2[%c45, %c0_124, %c0_125] : memref<49x2x256xf32, #tpu.memory_space<vmem>>, vector<1x2x256xf32>
    %272 = vector.shape_cast %271 : vector<1x2x256xf32> to vector<2x256xf32>
    %273 = arith.mulf %270, %272 : vector<2x256xf32>
    %274 = arith.addf %269, %273 : vector<2x256xf32>
    %275 = vector.extract_strided_slice %43 {offsets = [0, 100], sizes = [2, 256], strides = [1, 1]} : vector<2x358xf32> to vector<2x256xf32>
    %c46 = arith.constant 46 : index
    %c0_126 = arith.constant 0 : index
    %c0_127 = arith.constant 0 : index
    %276 = vector.load %arg2[%c46, %c0_126, %c0_127] : memref<49x2x256xf32, #tpu.memory_space<vmem>>, vector<1x2x256xf32>
    %277 = vector.shape_cast %276 : vector<1x2x256xf32> to vector<2x256xf32>
    %278 = arith.mulf %275, %277 : vector<2x256xf32>
    %279 = arith.addf %274, %278 : vector<2x256xf32>
    %280 = vector.extract_strided_slice %43 {offsets = [0, 101], sizes = [2, 256], strides = [1, 1]} : vector<2x358xf32> to vector<2x256xf32>
    %c47 = arith.constant 47 : index
    %c0_128 = arith.constant 0 : index
    %c0_129 = arith.constant 0 : index
    %281 = vector.load %arg2[%c47, %c0_128, %c0_129] : memref<49x2x256xf32, #tpu.memory_space<vmem>>, vector<1x2x256xf32>
    %282 = vector.shape_cast %281 : vector<1x2x256xf32> to vector<2x256xf32>
    %283 = arith.mulf %280, %282 : vector<2x256xf32>
    %284 = arith.addf %279, %283 : vector<2x256xf32>
    %285 = vector.extract_strided_slice %43 {offsets = [0, 102], sizes = [2, 256], strides = [1, 1]} : vector<2x358xf32> to vector<2x256xf32>
    %c48 = arith.constant 48 : index
    %c0_130 = arith.constant 0 : index
    %c0_131 = arith.constant 0 : index
    %286 = vector.load %arg2[%c48, %c0_130, %c0_131] : memref<49x2x256xf32, #tpu.memory_space<vmem>>, vector<1x2x256xf32>
    %287 = vector.shape_cast %286 : vector<1x2x256xf32> to vector<2x256xf32>
    %288 = arith.mulf %285, %287 : vector<2x256xf32>
    %289 = arith.addf %284, %288 : vector<2x256xf32>
    %290 = vector.extract_strided_slice %289 {offsets = [0, 0], sizes = [1, 256], strides = [1, 1]} : vector<2x256xf32> to vector<1x256xf32>
    %291 = vector.extract_strided_slice %289 {offsets = [1, 0], sizes = [1, 256], strides = [1, 1]} : vector<2x256xf32> to vector<1x256xf32>
    %292 = arith.addf %290, %291 : vector<1x256xf32>
    %c0_132 = arith.constant 0 : index
    %293 = memref.load %arg4[%c0_132] : memref<1xf32, #tpu.memory_space<smem>>
    %294 = vector.broadcast %293 : f32 to vector<1x256xf32>
    %295 = arith.addf %292, %294 : vector<1x256xf32>
    %296 = arith.negf %295 : vector<1x256xf32>
    %297 = math.exp %296 : vector<1x256xf32>
    %cst_133 = arith.constant 1.000000e+00 : f32
    %298 = vector.broadcast %cst_133 : f32 to vector<1x256xf32>
    %299 = arith.addf %298, %297 : vector<1x256xf32>
    %300 = arith.divf %298, %299 : vector<1x256xf32>
    %301 = vector.broadcast %300 : vector<1x256xf32> to vector<16x256xf32>
    %302 = arith.mulf %33, %301 : vector<16x256xf32>
    %c0_134 = arith.constant 0 : index
    %c0_135 = arith.constant 0 : index
    %c0_136 = arith.constant 0 : index
    %303 = vector.load %arg5[%c0_134, %c0_135, %c0_136] : memref<1x16x256xf32, #tpu.memory_space<vmem>>, vector<1x16x256xf32>
    %304 = vector.shape_cast %303 : vector<1x16x256xf32> to vector<16x256xf32>
    %305 = vector.shape_cast %302 : vector<16x256xf32> to vector<1x16x256xf32>
    tpu.vector_store %arg5[%c0_134, %c0_135, %c0_136], %305 {strides = array<i32>} : memref<1x16x256xf32, #tpu.memory_space<vmem>>, vector<1x16x256xf32>,
    return
  }
  func.func @transform_0(%arg0: i32) -> (i32, i32, i32) {
    %c0_i32 = arith.constant 0 : i32
    %c0_i32_0 = arith.constant 0 : i32
    %c0_i32_1 = arith.constant 0 : i32
    return %arg0, %c0_i32, %c0_i32_0 : i32, i32, i32
  }
  func.func @transform_1(%arg0: i32) -> (i32, i32, i32) {
    %c0_i32 = arith.constant 0 : i32
    %c0_i32_0 = arith.constant 0 : i32
    %c0_i32_1 = arith.constant 0 : i32
    %c0_i32_2 = arith.constant 0 : i32
    return %c0_i32, %c0_i32_0, %c0_i32_1 : i32, i32, i32
  }
  func.func @transform_2(%arg0: i32) -> i32 {
    %c0_i32 = arith.constant 0 : i32
    %c0_i32_0 = arith.constant 0 : i32
    return %c0_i32 : i32
  }
  func.func @transform_3(%arg0: i32) -> i32 {
    %c0_i32 = arith.constant 0 : i32
    %c0_i32_0 = arith.constant 0 : i32
    return %c0_i32 : i32
  }
  func.func @transform_4(%arg0: i32) -> (i32, i32, i32) {
    %c0_i32 = arith.constant 0 : i32
    %c0_i32_0 = arith.constant 0 : i32
    %c0_i32_1 = arith.constant 0 : i32
    return %arg0, %c0_i32, %c0_i32_0 : i32, i32, i32
  }
}

</mosaic_0001>

<llo_original>
// kernel: tpu_custom_call.1
$region0: #{tpu_custom_call.1}
  #allocation0 [shape = 'u32[]', space=smem, size = 0x4, offset = 0x4, fixed_abs, tag = 'smem constant byte address 0x4 - core index']
  #allocation1 [shape = 'u32[144,128]{1,0:T(1,128)}', space=vmem, size = 0x12000, scoped, tag = 'internal scratch']
  #allocation2 [shape = 'f32[18,1]{1,0:T(8,128)}', space=vmem, size = 0x3000, scoped, tag = 'scratch operand']
  #allocation3 [shape = 'f32[2,358]{1,0:T(2,128)}', space=vmem, size = 0xc00, scoped, tag = 'scratch operand']
  #allocation4 [shape = 'f32[1]{0:T(128)S(6)}', space=smem, size = 0x200, scoped, tag = 'scoped memory for tpu_custom_call.1']
  %s0 = inlined_call_operand.hbm [shape: f32[2,16,256], index: 0, kind: input, shape index: {}]
  %s1 = inlined_call_operand.hbm [shape: f32[49,2,256], index: 1, kind: input, shape index: {}]
  %s2 = inlined_call_operand.vmem [shape: f32[3], index: 2, kind: input, shape index: {}]
  %s3 = inlined_call_operand.<no memory space> [shape: f32[1], index: 3, kind: input, shape index: {}]
  %s4 = inlined_call_operand.hbm [shape: f32[2,16,256], index: 4, kind: output, shape index: {}]
  %s5 = sld [smem:[#allocation0]]
  $region61: #{tpu_custom_call.1} parent=0
    _
  %s7 = ssub.s32 1, %s5
  %s8 = scalar_select 0, %s7, %s5
  %9 = sst [smem:[#allocation4]] %s3
  $region1: #{tpu_custom_call.1} parent=0
    #allocation5 [shape = 'u8[32768]{0}', space=vmem, size = 0x8000, scoped, tag = 'input window, operand 0']
    #allocation6 [shape = 's32[2]{0}', space=sflag, size = 0x8, scoped, tag = 'scoped memory for tpu_custom_call.1']
    #allocation7 [shape = 's32[2]{0}', space=sflag, size = 0x8, scoped, tag = 'scoped memory for tpu_custom_call.1']
    #allocation8 [shape = 's32[2]{0}', space=sflag, size = 0x8, scoped, tag = 'scoped memory for tpu_custom_call.1']
    #allocation9 [shape = 'u8[100352]{0}', space=vmem, size = 0x18800, scoped, tag = 'input window, operand 1, single buffered']
    #allocation10 [shape = 's32[1]{0}', space=sflag, size = 0x4, scoped, tag = 'scoped memory for tpu_custom_call.1']
    #allocation11 [shape = 'u8[512]{0}', space=smem, size = 0x200, scoped, tag = 'input window, operand 2, single buffered']
    #allocation12 [shape = 'u8[32768]{0}', space=vmem, size = 0x8000, scoped, tag = 'output window, operand 0']
    %10 = vsyncpa [#allocation6], 0
    %s11 = scalar_lea.sflag [#allocation6], 1
    %12 = vsyncpa %s11, 0
    %13 = vsyncpa [#allocation10], 0
    %14 = vsyncpa [#allocation8], 0
    %15 = vsyncpa [#allocation7], 0
    %s16 = scalar_lea.sflag [#allocation7], 1
    %17 = vsyncpa %s16, 0
    loop: start=0, step=1, limit=4
    $region2: #{tpu_custom_call.1} parent=1 // loop_pre_header
      _
    $region3: #{tpu_custom_call.1} parent=1 // loop_header
      %s19 = sphi 0, %s23
      %p20 = scmp.ge.s32.totalorder %s19, 4
      %s29 = sphi 0, %s31
      %s32 = sphi 0, %s29
      %s33 = sphi 0, %s32
      %s49 = sphi 0, %s33
      %s53 = sphi 0, %s53
      %s55 = sphi 0, %s53
      %s56 = sphi 0, %s55
      %s70 = sphi 0, %s56
      %s74 = sphi 0, %s74
      %s76 = sphi 0, %s74
      %s77 = sphi 0, %s76
      %s91 = sphi 0, %s77
      %s95 = sphi 0, %s95
      %s97 = sphi 0, %s95
      %s98 = sphi 0, %s97
      %s112 = sphi 0, %s98
      %s118 = sphi 0, %s120
      %s121 = sphi 0, %s118
      %s122 = sphi 0, %s121
      %s138 = sphi 0, %s122
    $region4: #{tpu_custom_call.1} parent=1 // loop_header_branch
      %22 = sbr.rel (%p20) target = $region8
    $region5: #{tpu_custom_call.1} parent=1 // loop_body
      %s24 = ssub.s32 %s19, 1
      %s25 = ssub.s32 %s19, 2
      %s26 = sadd.s32 %s19, 1
      %s27 = ssub.s32 %s19, %s26
      %p28 = scmp.eq.s32.totalorder %s27, 0
      %s30 = sadd.s32 %s29, 1
      %s31 = scalar_select %p28, %s29, %s30
      %p34 = pneg %p28
      %p35 = scmp.eq.s32.totalorder %s19, 1
      %p36 = por %p34, %p35
      %p37 = scmp.ne.s32.totalorder %s29, %s32
      %p38 = scmp.eq.s32.totalorder %s19, 0
      %p39 = por %p37, %p38
      %p40 = scmp.ne.s32.totalorder %s29, %s32
      %p41 = scmp.eq.s32.totalorder %s24, 1
      %p42 = por %p40, %p41
      %p43 = scmp.ne.s32.totalorder %s32, %s33
      %p44 = scmp.eq.s32.totalorder %s24, 0
      %p45 = por %p43, %p44
      %p46 = scmp.ne.s32.totalorder %s32, %s33
      %p47 = scmp.eq.s32.totalorder %s25, 1
      %p48 = por %p46, %p47
      %p50 = scmp.ne.s32.totalorder %s33, %s49
      %p51 = scmp.eq.s32.totalorder %s25, 0
      %p52 = por %p50, %p51
      %s54 = sadd.s32 %s53, 1
      %p57 = scmp.eq.s32.totalorder %s19, 1
      %p58 = scmp.ne.s32.totalorder %s53, %s55
      %p59 = scmp.eq.s32.totalorder %s19, 0
      %p60 = por %p58, %p59
      %p61 = scmp.ne.s32.totalorder %s53, %s55
      %p62 = scmp.eq.s32.totalorder %s24, 1
      %p63 = por %p61, %p62
      %p64 = scmp.ne.s32.totalorder %s55, %s56
      %p65 = scmp.eq.s32.totalorder %s24, 0
      %p66 = por %p64, %p65
      %p67 = scmp.ne.s32.totalorder %s55, %s56
      %p68 = scmp.eq.s32.totalorder %s25, 1
      %p69 = por %p67, %p68
      %p71 = scmp.ne.s32.totalorder %s56, %s70
      %p72 = scmp.eq.s32.totalorder %s25, 0
      %p73 = por %p71, %p72
      %s75 = sadd.s32 %s74, 1
      %p78 = scmp.eq.s32.totalorder %s19, 1
      %p79 = scmp.ne.s32.totalorder %s74, %s76
      %p80 = scmp.eq.s32.totalorder %s19, 0
      %p81 = por %p79, %p80
      %p82 = scmp.ne.s32.totalorder %s74, %s76
      %p83 = scmp.eq.s32.totalorder %s24, 1
      %p84 = por %p82, %p83
      %p85 = scmp.ne.s32.totalorder %s76, %s77
      %p86 = scmp.eq.s32.totalorder %s24, 0
      %p87 = por %p85, %p86
      %p88 = scmp.ne.s32.totalorder %s76, %s77
      %p89 = scmp.eq.s32.totalorder %s25, 1
      %p90 = por %p88, %p89
      %p92 = scmp.ne.s32.totalorder %s77, %s91
      %p93 = scmp.eq.s32.totalorder %s25, 0
      %p94 = por %p92, %p93
      %s96 = sadd.s32 %s95, 1
      %p99 = scmp.eq.s32.totalorder %s19, 1
      %p100 = scmp.ne.s32.totalorder %s95, %s97
      %p101 = scmp.eq.s32.totalorder %s19, 0
      %p102 = por %p100, %p101
      %p103 = scmp.ne.s32.totalorder %s95, %s97
      %p104 = scmp.eq.s32.totalorder %s24, 1
      %p105 = por %p103, %p104
      %p106 = scmp.ne.s32.totalorder %s97, %s98
      %p107 = scmp.eq.s32.totalorder %s24, 0
      %p108 = por %p106, %p107
      %p109 = scmp.ne.s32.totalorder %s97, %s98
      %p110 = scmp.eq.s32.totalorder %s25, 1
      %p111 = por %p109, %p110
      %p113 = scmp.ne.s32.totalorder %s98, %s112
      %p114 = scmp.eq.s32.totalorder %s25, 0
      %p115 = por %p113, %p114
      %s116 = ssub.s32 %s19, %s26
      %p117 = scmp.eq.s32.totalorder %s116, 0
      %s119 = sadd.s32 %s118, 1
      %s120 = scalar_select %p117, %s118, %s119
      %p123 = pneg %p117
      %p124 = scmp.eq.s32.totalorder %s19, 1
      %p125 = por %p123, %p124
      %p126 = scmp.ne.s32.totalorder %s118, %s121
      %p127 = scmp.eq.s32.totalorder %s19, 0
      %p128 = por %p126, %p127
      %p129 = scmp.ne.s32.totalorder %s118, %s121
      %p130 = scmp.eq.s32.totalorder %s24, 1
      %p131 = por %p129, %p130
      %p132 = scmp.ne.s32.totalorder %s121, %s122
      %p133 = scmp.eq.s32.totalorder %s24, 0
      %p134 = por %p132, %p133
      %p135 = scmp.ne.s32.totalorder %s121, %s122
      %p136 = scmp.eq.s32.totalorder %s25, 1
      %p137 = por %p135, %p136
      %p139 = scmp.ne.s32.totalorder %s122, %s138
      %p140 = scmp.eq.s32.totalorder %s25, 0
      %p141 = por %p139, %p140
      %p142 = scmp.le.s32.totalorder 1, %s19
      %p143 = scmp.lt.s32.totalorder %s19, 3
      %p144 = pnand %p142, %p143
      %p145 = pneg %p144
      // Predicated region
      $region9: #{tpu_custom_call.1} parent=5 // pred_check
        _
      $region10: #{tpu_custom_call.1} parent=5 // pred_check_branch
        %147 = sbr.rel (%p144) target = $region12
      $region11: #{tpu_custom_call.1} parent=5 // pred_region
        %s148 = ssub.s32 %s19, 1
        // Predicated region
        $region13: #{tpu_custom_call.1} parent=11 // pred_check
          %p149 = pneg %p66
        $region14: #{tpu_custom_call.1} parent=11 // pred_check_branch
          %151 = sbr.rel (%p149) target = $region16
        $region15: #{tpu_custom_call.1} parent=11 // pred_region
          %s153 = ssub.s32 3136, 3136
          %154 = vsyncadd [#allocation10], %s153
          %s155 = sshll.u32 [#allocation9], 4
          %s156 = int_to_ptr.vmem [resolvable:$true] %s155
          %161 = dma.hbm_to_vmem [thread:$0]  %s1, 3136, %s156, [#allocation10], 64, 64, 4
        $region16: #{tpu_custom_call.1} parent=11 // pred_fallthru
          _
        // Predicated region
        $region17: #{tpu_custom_call.1} parent=11 // pred_check
          %p162 = pneg %p87
        $region18: #{tpu_custom_call.1} parent=11 // pred_check_branch
          %164 = sbr.rel (%p162) target = $region20
        $region19: #{tpu_custom_call.1} parent=11 // pred_region
          %s166 = ssub.s32 16, 16
          %167 = vsyncadd [#allocation8], %s166
          %s169 = sshll.u32 %s2, 4
          %s170 = int_to_ptr.vmem [resolvable:$true] %s169
          %172 = dma.vmem_to_smem %s170, 16, [#allocation11], [#allocation8]
        $region20: #{tpu_custom_call.1} parent=11 // pred_fallthru
          _
        // Predicated region
        $region21: #{tpu_custom_call.1} parent=11 // pred_check
          %p173 = pneg %p108
        $region22: #{tpu_custom_call.1} parent=11 // pred_check_branch
          %175 = sbr.rel (%p173) target = $region24
        $region23: #{tpu_custom_call.1} parent=11 // pred_region
          _
        $region24: #{tpu_custom_call.1} parent=11 // pred_fallthru
          _
      $region12: #{tpu_custom_call.1} parent=5 // pred_fallthru
        _
      %p176 = scmp.lt.s32.totalorder %s19, 2
      // Predicated region
      $region25: #{tpu_custom_call.1} parent=5 // pred_check
        %p177 = pneg %p176
      $region26: #{tpu_custom_call.1} parent=5 // pred_check_branch
        %179 = sbr.rel (%p177) target = $region28
      $region27: #{tpu_custom_call.1} parent=5 // pred_region
        // Predicated region
        $region29: #{tpu_custom_call.1} parent=27 // pred_check
          %p180 = pneg %p39
        $region30: #{tpu_custom_call.1} parent=27 // pred_check_branch
          %182 = sbr.rel (%p180) target = $region32
        $region31: #{tpu_custom_call.1} parent=27 // pred_region
          %s183 = sand.u32 %s29, 1
          %s184 = scalar_lea.sflag [#allocation6], %s183
          %s185 = sand.u32 %s29, 1
          %s186 = smul.addr %s185, 32
          %s187 = scalar_lea.vmem [#allocation5], %s186
          %s189 = ssub.s32 512, 512
          %190 = vsyncadd %s184, %s189
          %s191 = smul.addr %s19, 4
          %s192 = smul.addr %s191, 128
          %s193 = scalar_lea.hbm %s0, %s192
          %s194 = sshll.u32 %s187, 4
          %s195 = int_to_ptr.vmem [resolvable:$true] %s194
          %200 = dma.hbm_to_vmem [thread:$0]  %s193, 512, %s195, %s184, 256, 256, 16
        $region32: #{tpu_custom_call.1} parent=27 // pred_fallthru
          _
      $region28: #{tpu_custom_call.1} parent=5 // pred_fallthru
        _
      %p201 = scmp.le.s32.totalorder 1, %s19
      %p202 = scmp.lt.s32.totalorder %s19, 3
      %p203 = pnand %p201, %p202
      %p204 = pneg %p203
      // Predicated region
      $region33: #{tpu_custom_call.1} parent=5 // pred_check
        _
      $region34: #{tpu_custom_call.1} parent=5 // pred_check_branch
        %206 = sbr.rel (%p203) target = $region36
      $region35: #{tpu_custom_call.1} parent=5 // pred_region
        %s207 = ssub.s32 %s19, 1
        %s208 = sand.u32 %s32, 1
        %s209 = scalar_lea.sflag [#allocation6], %s208
        %s210 = sand.u32 %s32, 1
        %s211 = smul.addr %s210, 32
        %s212 = scalar_lea.vmem [#allocation5], %s211
        // Predicated region
        $region37: #{tpu_custom_call.1} parent=35 // pred_check
          %p213 = pneg %p45
        $region38: #{tpu_custom_call.1} parent=35 // pred_check_branch
          %215 = sbr.rel (%p213) target = $region40
        $region39: #{tpu_custom_call.1} parent=35 // pred_region
          %216 = dma.done %s209, 512
        $region40: #{tpu_custom_call.1} parent=35 // pred_fallthru
          _
        // Predicated region
        $region41: #{tpu_custom_call.1} parent=35 // pred_check
          %p217 = pneg %p66
        $region42: #{tpu_custom_call.1} parent=35 // pred_check_branch
          %219 = sbr.rel (%p217) target = $region44
        $region43: #{tpu_custom_call.1} parent=35 // pred_region
          %220 = dma.done [#allocation10], 3136
        $region44: #{tpu_custom_call.1} parent=35 // pred_fallthru
          _
        // Predicated region
        $region45: #{tpu_custom_call.1} parent=35 // pred_check
          %p221 = pneg %p87
        $region46: #{tpu_custom_call.1} parent=35 // pred_check_branch
          %223 = sbr.rel (%p221) target = $region48
        $region47: #{tpu_custom_call.1} parent=35 // pred_region
          %224 = dma.done [#allocation8], 16
        $region48: #{tpu_custom_call.1} parent=35 // pred_fallthru
          _
        %225 = sfence
        %s226 = sand.u32 %s32, 1
        %s227 = scalar_lea.sflag [#allocation6], %s226
        %s228 = sand.u32 %s32, 1
        %s229 = smul.addr %s228, 32
        %s230 = scalar_lea.vmem [#allocation5], %s229
        %p231 = pneg %p45
        %p232 = pneg %p42
        %p233 = pneg %p66
        %p234 = pneg %p63
        %p235 = pneg %p87
        %p236 = pneg %p84
        %p237 = pneg %p108
        %p238 = pneg %p105
        %p239 = pneg %p134
        %p240 = pneg %p131
        %s241 = sand.u32 %s121, 1
        %s242 = scalar_lea.sflag [#allocation7], %s241
        %s243 = sand.u32 %s121, 1
        %s244 = smul.addr %s243, 32
        %s245 = scalar_lea.vmem [#allocation12], %s244
        %v246 = vld [vmem:[%s212] sm:$0xff]
        %v247 = vld [vmem:[%s212 + $0x8] sm:$0xff]
        %v248 = vld [vmem:[%s212 + $0x10] sm:$0xff]
        %v249 = vld [vmem:[%s212 + $0x18] sm:$0xff]
        %v250 = vadd.f32 %v246, %v247
        %251 = vadd.xlane.f32.xlu0 %v250
        %v252 = vpop.xlane.xlu0 %251
        %v253 = vadd.f32 %v248, %v249
        %254 = vadd.xlane.f32.xlu0 %v253
        %v255 = vpop.xlane.xlu0 %254
        %v256 = vmul.f32 %v252, 0.00390625
        %v257 = vmul.f32 %v255, 0.00390625
        %v258 = vmax.f32 %v246, %v247
        %259 = vmax.xlane.f32.xlu0 %v258
        %v260 = vpop.xlane.xlu0 %259
        %v261 = vmax.f32 %v248, %v249
        %262 = vmax.xlane.f32.xlu0 %v261
        %v263 = vpop.xlane.xlu0 %262
        %v264 = vadd.f32 %v256, %v260
        %v265 = vadd.f32 %v257, %v263
        %vm266 = vcmask 0
        %267 = vst.msk [vmem:[#allocation2] sm:$0x1] %vm266, 0.0
        %268 = vst.msk [vmem:[#allocation2 + $0x11] sm:$0x1] %vm266, 0.0
        %vm269 = vcmask 7168
        %270 = vst.msk [vmem:[#allocation2 + $0x1] sm:$0xff] %vm269, %v264
        %271 = vst.msk [vmem:[#allocation2 + $0x9] sm:$0xff] %vm269, %v265
        %s272 = sld [smem:[#allocation11]]
        %v273 = vld [vmem:[#allocation2] sm:$0xff]
        %v274 = vld [vmem:[#allocation2 + $0x8] sm:$0xff]
        %v275 = vstv %s272
        %v276 = vmul.f32 %v275, %v273
        %v277 = vmul.f32 %v275, %v274
        %s278 = sld [smem:[#allocation11 + $0x1]]
        %v279 = vld [vmem:[#allocation2 + $0x1] sm:$0xff]
        %v280 = vld [vmem:[#allocation2 + $0x9] sm:$0xff]
        %v281 = vstv %s278
        %v282 = vmul.f32 %v281, %v279
        %v283 = vmul.f32 %v281, %v280
        %v284 = vadd.f32 %v276, %v282
        %v285 = vadd.f32 %v277, %v283
        %s286 = sld [smem:[#allocation11 + $0x2]]
        %v287 = vld [vmem:[#allocation2 + $0x2] sm:$0xff]
        %v288 = vld [vmem:[#allocation2 + $0xa] sm:$0xff]
        %v289 = vstv %s286
        %v290 = vmul.f32 %v289, %v287
        %v291 = vmul.f32 %v289, %v288
        %v292 = vadd.f32 %v284, %v290
        %v293 = vadd.f32 %v285, %v291
        %v294 = vxor.u32 %v292, 2147483648
        %v295 = vxor.u32 %v293, 2147483648
        %v296 = vmul.f32 %v294, 1.442695
        %v297 = vpow.pop %v296
        %v298 = vmul.f32 %v295, 1.442695
        %v299 = vpow.pop %v298
        %v300 = vadd.f32 %v297, 1.0
        %v301 = vadd.f32 %v299, 1.0
        %v302 = vrcp.pop %v300
        %v303 = vmul.f32 1.0, %v302
        %v304 = vrcp.pop %v301
        %v305 = vmul.f32 1.0, %v304
        %307 = vset.pattern.permute.xlu0 0
        %308 = vperm.xlu0 %307, %v303
        %v309 = vpop.permute.xlu0 %308
        %312 = vset.pattern.permute.xlu0 0
        %313 = vperm.xlu0 %312, %v305
        %v314 = vpop.permute.xlu0 %313
        %v316 = vmul.f32 %v246, %v309
        %v317 = vmul.f32 %v247, %v309
        %v318 = vmul.f32 %v248, %v314
        %v319 = vmul.f32 %v249, %v314
        %v320 = vadd.f32 %v316, %v318
        %v321 = vrot.slane %v320, 4
        %v322 = vadd.f32 %v320, %v321
        %v323 = vrot.slane %v322, 2
        %v324 = vadd.f32 %v322, %v323
        %v325 = vrot.slane %v324, 1
        %v326 = vadd.f32 %v324, %v325
        %v327 = vadd.f32 %v317, %v319
        %v328 = vrot.slane %v327, 4
        %v329 = vadd.f32 %v327, %v328
        %v330 = vrot.slane %v329, 2
        %v331 = vadd.f32 %v329, %v330
        %v332 = vrot.slane %v331, 1
        %v333 = vadd.f32 %v331, %v332
        %v334 = vmax.f32 %v316, %v318
        %v335 = vrot.slane %v334, 4
        %v336 = vmax.f32 %v334, %v335
        %v337 = vrot.slane %v336, 2
        %v338 = vmax.f32 %v336, %v337
        %v339 = vrot.slane %v338, 1
        %v340 = vmax.f32 %v338, %v339
        %v341 = vmax.f32 %v317, %v319
        %v342 = vrot.slane %v341, 4
        %v343 = vmax.f32 %v341, %v342
        %v344 = vrot.slane %v343, 2
        %v345 = vmax.f32 %v343, %v344
        %v346 = vrot.slane %v345, 1
        %v347 = vmax.f32 %v345, %v346
        %vm348 = vcmask 410624
        %349 = vst.msk [vmem:[#allocation3] sm:$0x3] %vm348, 0.0
        %vm350 = vcmask 828824
        %351 = vst.msk [vmem:[#allocation3 + $0x4] sm:$0x3] %vm350, 0.0
        %v354 = vcombine.low %v326, %v333
        %v356 = vunpack.c.l.s4 1966171168
        %v357 = vunpack.c.0.s8 %v356
        %v358 = vlaneseq
        %v359 = vshrl.u32 %v358, 7
        %v360 = vsub.s32 %v357, %v359
        %v361 = vrot.slane %v354, %v360
        %v363 = vunpack.c.l.s4 1966171168
        %v364 = vunpack.c.0.s8 %v363
        %v365 = vlaneseq
        %v366 = vshrl.u32 %v365, 7
        %v367 = vsub.s32 %v364, %v366
        %v368 = vrot.slane %v361, %v367
        %369 = vrot.lane.b32.xlu0 %v368, 51
        %v370 = vpop.permute.xlu0 %369
        %v371 = vrot.slane %v370, 7
        %vm372 = vcmask 416768
        %v373 = vsel %vm372, %v371, %v370
        %v375 = vlaneseq
        %vm376 = vcmp.ge.s32.totalorder %v375, 51
        %vm377 = vcmp.lt.s32.totalorder %v375, 307
        %vm378 = vmand %vm376, %vm377
        %379 = vst.msk [vmem:[#allocation3] ss:$2 sm:$0x7] %vm378, %v373
        %v382 = vcombine.low %v340, %v347
        %v384 = vunpack.c.l.s4 1966171168
        %v385 = vunpack.c.0.s8 %v384
        %v386 = vlaneseq
        %v387 = vshrl.u32 %v386, 7
        %v388 = vsub.s32 %v385, %v387
        %v389 = vrot.slane %v382, %v388
        %v391 = vunpack.c.l.s4 1966171168
        %v392 = vunpack.c.0.s8 %v391
        %v393 = vlaneseq
        %v394 = vshrl.u32 %v393, 7
        %v395 = vsub.s32 %v392, %v394
        %v396 = vrot.slane %v389, %v395
        %397 = vrot.lane.b32.xlu0 %v396, 51
        %v398 = vpop.permute.xlu0 %397
        %v399 = vrot.slane %v398, 7
        %v400 = vsel %vm372, %v399, %v398
        %s402 = scalar_lea.vmem [#allocation3], 1
        %403 = vst.msk [vmem:[%s402] ss:$2 sm:$0x7] %vm378, %v400
        %v404 = vld [vmem:[#allocation3] sm:$0x3f]
        %v405 = vld [vmem:[#allocation9] sm:$0xf]
        %v406 = vmul.f32 %v404, %v405
        %v407 = vadd.f32 %v406, 0.0
        %s408 = scalar_lea.vmem [#allocation9], 4
        %v409 = vld [vmem:[%s408] sm:$0xf]
        %411 = vrot.lane.b32.xlu0 %v409, 1
        %v412 = vpop.permute.xlu0 %411
        %v413 = vrot.slane %v412, 6
        %v414 = vsel %vm269, %v413, %v412
        %v416 = vmul.f32 %v404, %v414
        %418 = vrot.lane.b32.xlu0 %v416, 127
        %v419 = vpop.permute.xlu0 %418
        %v420 = vrot.slane %v419, 2
        %vm421 = vcmask 1039360
        %v422 = vsel %vm421, %v419, %v420
        %v424 = vadd.f32 %v407, %v422
        %s425 = scalar_lea.vmem [#allocation9], 8
        %v426 = vld [vmem:[%s425] sm:$0xf]
        %428 = vrot.lane.b32.xlu0 %v426, 2
        %v429 = vpop.permute.xlu0 %428
        %v430 = vrot.slane %v429, 6
        %vm431 = vcmask 15360
        %v432 = vsel %vm431, %v430, %v429
        %v434 = vmul.f32 %v404, %v432
        %436 = vrot.lane.b32.xlu0 %v434, 126
        %v437 = vpop.permute.xlu0 %436
        %v438 = vrot.slane %v437, 2
        %vm439 = vcmask 1031168
        %v440 = vsel %vm439, %v437, %v438
        %v442 = vadd.f32 %v424, %v440
        %s443 = scalar_lea.vmem [#allocation9], 12
        %v444 = vld [vmem:[%s443] sm:$0xf]
        %446 = vrot.lane.b32.xlu0 %v444, 3
        %v447 = vpop.permute.xlu0 %446
        %v448 = vrot.slane %v447, 6
        %vm449 = vcmask 23552
        %v450 = vsel %vm449, %v448, %v447
        %v452 = vmul.f32 %v404, %v450
        %454 = vrot.lane.b32.xlu0 %v452, 125
        %v455 = vpop.permute.xlu0 %454
        %v456 = vrot.slane %v455, 2
        %vm457 = vcmask 1022976
        %v458 = vsel %vm457, %v455, %v456
        %v460 = vadd.f32 %v442, %v458
        %s461 = scalar_lea.vmem [#allocation9], 16
        %v462 = vld [vmem:[%s461] sm:$0xf]
        %464 = vrot.lane.b32.xlu0 %v462, 4
        %v465 = vpop.permute.xlu0 %464
        %v466 = vrot.slane %v465, 6
        %vm467 = vcmask 31744
        %v468 = vsel %vm467, %v466, %v465
        %v470 = vmul.f32 %v404, %v468
        %472 = vrot.lane.b32.xlu0 %v470, 124
        %v473 = vpop.permute.xlu0 %472
        %v474 = vrot.slane %v473, 2
        %vm475 = vcmask 1014784
        %v476 = vsel %vm475, %v473, %v474
        %v478 = vadd.f32 %v460, %v476
        %s479 = scalar_lea.vmem [#allocation9], 20
        %v480 = vld [vmem:[%s479] sm:$0xf]
        %482 = vrot.lane.b32.xlu0 %v480, 5
        %v483 = vpop.permute.xlu0 %482
        %v484 = vrot.slane %v483, 6
        %vm485 = vcmask 39936
        %v486 = vsel %vm485, %v484, %v483
        %v488 = vmul.f32 %v404, %v486
        %490 = vrot.lane.b32.xlu0 %v488, 123
        %v491 = vpop.permute.xlu0 %490
        %v492 = vrot.slane %v491, 2
        %vm493 = vcmask 1006592
        %v494 = vsel %vm493, %v491, %v492
        %v496 = vadd.f32 %v478, %v494
        %s497 = scalar_lea.vmem [#allocation9], 24
        %v498 = vld [vmem:[%s497] sm:$0xf]
        %500 = vrot.lane.b32.xlu0 %v498, 6
        %v501 = vpop.permute.xlu0 %500
        %v502 = vrot.slane %v501, 6
        %vm503 = vcmask 48128
        %v504 = vsel %vm503, %v502, %v501
        %v506 = vmul.f32 %v404, %v504
        %508 = vrot.lane.b32.xlu0 %v506, 122
        %v509 = vpop.permute.xlu0 %508
        %v510 = vrot.slane %v509, 2
        %vm511 = vcmask 998400
        %v512 = vsel %vm511, %v509, %v510
        %v514 = vadd.f32 %v496, %v512
        %s515 = scalar_lea.vmem [#allocation9], 28
        %v516 = vld [vmem:[%s515] sm:$0xf]
        %518 = vrot.lane.b32.xlu0 %v516, 16
        %v519 = vpop.permute.xlu0 %518
        %v520 = vrot.slane %v519, 6
        %vm521 = vcmask 130048
        %v522 = vsel %vm521, %v520, %v519
        %v524 = vmul.f32 %v404, %v522
        %526 = vrot.lane.b32.xlu0 %v524, 112
        %v527 = vpop.permute.xlu0 %526
        %v528 = vrot.slane %v527, 2
        %vm529 = vcmask 916480
        %v530 = vsel %vm529, %v527, %v528
        %v532 = vadd.f32 %v514, %v530
        %s533 = scalar_lea.vmem [#allocation9], 32
        %v534 = vld [vmem:[%s533] sm:$0xf]
        %536 = vrot.lane.b32.xlu0 %v534, 17
        %v537 = vpop.permute.xlu0 %536
        %v538 = vrot.slane %v537, 6
        %vm539 = vcmask 138240
        %v540 = vsel %vm539, %v538, %v537
        %v542 = vmul.f32 %v404, %v540
        %544 = vrot.lane.b32.xlu0 %v542, 111
        %v545 = vpop.permute.xlu0 %544
        %v546 = vrot.slane %v545, 2
        %vm547 = vcmask 908288
        %v548 = vsel %vm547, %v545, %v546
        %v550 = vadd.f32 %v532, %v548
        %s551 = scalar_lea.vmem [#allocation9], 36
        %v552 = vld [vmem:[%s551] sm:$0xf]
        %554 = vrot.lane.b32.xlu0 %v552, 18
        %v555 = vpop.permute.xlu0 %554
        %v556 = vrot.slane %v555, 6
        %vm557 = vcmask 146432
        %v558 = vsel %vm557, %v556, %v555
        %v560 = vmul.f32 %v404, %v558
        %562 = vrot.lane.b32.xlu0 %v560, 110
        %v563 = vpop.permute.xlu0 %562
        %v564 = vrot.slane %v563, 2
        %vm565 = vcmask 900096
        %v566 = vsel %vm565, %v563, %v564
        %v568 = vadd.f32 %v550, %v566
        %s569 = scalar_lea.vmem [#allocation9], 40
        %v570 = vld [vmem:[%s569] sm:$0xf]
        %572 = vrot.lane.b32.xlu0 %v570, 19
        %v573 = vpop.permute.xlu0 %572
        %v574 = vrot.slane %v573, 6
        %vm575 = vcmask 154624
        %v576 = vsel %vm575, %v574, %v573
        %v578 = vmul.f32 %v404, %v576
        %580 = vrot.lane.b32.xlu0 %v578, 109
        %v581 = vpop.permute.xlu0 %580
        %v582 = vrot.slane %v581, 2
        %vm583 = vcmask 891904
        %v584 = vsel %vm583, %v581, %v582
        %v586 = vadd.f32 %v568, %v584
        %s587 = scalar_lea.vmem [#allocation9], 44
        %v588 = vld [vmem:[%s587] sm:$0xf]
        %590 = vrot.lane.b32.xlu0 %v588, 20
        %v591 = vpop.permute.xlu0 %590
        %v592 = vrot.slane %v591, 6
        %vm593 = vcmask 162816
        %v594 = vsel %vm593, %v592, %v591
        %v596 = vmul.f32 %v404, %v594
        %598 = vrot.lane.b32.xlu0 %v596, 108
        %v599 = vpop.permute.xlu0 %598
        %v600 = vrot.slane %v599, 2
        %vm601 = vcmask 883712
        %v602 = vsel %vm601, %v599, %v600
        %v604 = vadd.f32 %v586, %v602
        %s605 = scalar_lea.vmem [#allocation9], 48
        %v606 = vld [vmem:[%s605] sm:$0xf]
        %608 = vrot.lane.b32.xlu0 %v606, 21
        %v609 = vpop.permute.xlu0 %608
        %v610 = vrot.slane %v609, 6
        %vm611 = vcmask 171008
        %v612 = vsel %vm611, %v610, %v609
        %v614 = vmul.f32 %v404, %v612
        %616 = vrot.lane.b32.xlu0 %v614, 107
        %v617 = vpop.permute.xlu0 %616
        %v618 = vrot.slane %v617, 2
        %vm619 = vcmask 875520
        %v620 = vsel %vm619, %v617, %v618
        %v622 = vadd.f32 %v604, %v620
        %s623 = scalar_lea.vmem [#allocation9], 52
        %v624 = vld [vmem:[%s623] sm:$0xf]
        %626 = vrot.lane.b32.xlu0 %v624, 22
        %v627 = vpop.permute.xlu0 %626
        %v628 = vrot.slane %v627, 6
        %vm629 = vcmask 179200
        %v630 = vsel %vm629, %v628, %v627
        %v632 = vmul.f32 %v404, %v630
        %634 = vrot.lane.b32.xlu0 %v632, 106
        %v635 = vpop.permute.xlu0 %634
        %v636 = vrot.slane %v635, 2
        %vm637 = vcmask 867328
        %v638 = vsel %vm637, %v635, %v636
        %v640 = vadd.f32 %v622, %v638
        %s641 = scalar_lea.vmem [#allocation9], 56
        %v642 = vld [vmem:[%s641] sm:$0xf]
        %644 = vrot.lane.b32.xlu0 %v642, 32
        %v645 = vpop.permute.xlu0 %644
        %v646 = vrot.slane %v645, 6
        %vm647 = vcmask 261120
        %v648 = vsel %vm647, %v646, %v645
        %v650 = vmul.f32 %v404, %v648
        %652 = vrot.lane.b32.xlu0 %v650, 96
        %v653 = vpop.permute.xlu0 %652
        %v654 = vrot.slane %v653, 2
        %vm655 = vcmask 785408
        %v656 = vsel %vm655, %v653, %v654
        %v658 = vadd.f32 %v640, %v656
        %s659 = scalar_lea.vmem [#allocation9], 60
        %v660 = vld [vmem:[%s659] sm:$0xf]
        %662 = vrot.lane.b32.xlu0 %v660, 33
        %v663 = vpop.permute.xlu0 %662
        %v664 = vrot.slane %v663, 6
        %vm665 = vcmask 269312
        %v666 = vsel %vm665, %v664, %v663
        %v668 = vmul.f32 %v404, %v666
        %670 = vrot.lane.b32.xlu0 %v668, 95
        %v671 = vpop.permute.xlu0 %670
        %v672 = vrot.slane %v671, 2
        %vm673 = vcmask 777216
        %v674 = vsel %vm673, %v671, %v672
        %v676 = vadd.f32 %v658, %v674
        %s677 = scalar_lea.vmem [#allocation9], 64
        %v678 = vld [vmem:[%s677] sm:$0xf]
        %680 = vrot.lane.b32.xlu0 %v678, 34
        %v681 = vpop.permute.xlu0 %680
        %v682 = vrot.slane %v681, 6
        %vm683 = vcmask 277504
        %v684 = vsel %vm683, %v682, %v681
        %v686 = vmul.f32 %v404, %v684
        %688 = vrot.lane.b32.xlu0 %v686, 94
        %v689 = vpop.permute.xlu0 %688
        %v690 = vrot.slane %v689, 2
        %vm691 = vcmask 769024
        %v692 = vsel %vm691, %v689, %v690
        %v694 = vadd.f32 %v676, %v692
        %s695 = scalar_lea.vmem [#allocation9], 68
        %v696 = vld [vmem:[%s695] sm:$0xf]
        %698 = vrot.lane.b32.xlu0 %v696, 35
        %v699 = vpop.permute.xlu0 %698
        %v700 = vrot.slane %v699, 6
        %vm701 = vcmask 285696
        %v702 = vsel %vm701, %v700, %v699
        %v704 = vmul.f32 %v404, %v702
        %706 = vrot.lane.b32.xlu0 %v704, 93
        %v707 = vpop.permute.xlu0 %706
        %v708 = vrot.slane %v707, 2
        %vm709 = vcmask 760832
        %v710 = vsel %vm709, %v707, %v708
        %v712 = vadd.f32 %v694, %v710
        %s713 = scalar_lea.vmem [#allocation9], 72
        %v714 = vld [vmem:[%s713] sm:$0xf]
        %716 = vrot.lane.b32.xlu0 %v714, 36
        %v717 = vpop.permute.xlu0 %716
        %v718 = vrot.slane %v717, 6
        %vm719 = vcmask 293888
        %v720 = vsel %vm719, %v718, %v717
        %v722 = vmul.f32 %v404, %v720
        %724 = vrot.lane.b32.xlu0 %v722, 92
        %v725 = vpop.permute.xlu0 %724
        %v726 = vrot.slane %v725, 2
        %vm727 = vcmask 752640
        %v728 = vsel %vm727, %v725, %v726
        %v730 = vadd.f32 %v712, %v728
        %s731 = scalar_lea.vmem [#allocation9], 76
        %v732 = vld [vmem:[%s731] sm:$0xf]
        %734 = vrot.lane.b32.xlu0 %v732, 37
        %v735 = vpop.permute.xlu0 %734
        %v736 = vrot.slane %v735, 6
        %vm737 = vcmask 302080
        %v738 = vsel %vm737, %v736, %v735
        %v740 = vmul.f32 %v404, %v738
        %742 = vrot.lane.b32.xlu0 %v740, 91
        %v743 = vpop.permute.xlu0 %742
        %v744 = vrot.slane %v743, 2
        %vm745 = vcmask 744448
        %v746 = vsel %vm745, %v743, %v744
        %v748 = vadd.f32 %v730, %v746
        %s749 = scalar_lea.vmem [#allocation9], 80
        %v750 = vld [vmem:[%s749] sm:$0xf]
        %752 = vrot.lane.b32.xlu0 %v750, 38
        %v753 = vpop.permute.xlu0 %752
        %v754 = vrot.slane %v753, 6
        %vm755 = vcmask 310272
        %v756 = vsel %vm755, %v754, %v753
        %v758 = vmul.f32 %v404, %v756
        %760 = vrot.lane.b32.xlu0 %v758, 90
        %v761 = vpop.permute.xlu0 %760
        %v762 = vrot.slane %v761, 2
        %vm763 = vcmask 736256
        %v764 = vsel %vm763, %v761, %v762
        %v766 = vadd.f32 %v748, %v764
        %s767 = scalar_lea.vmem [#allocation9], 84
        %v768 = vld [vmem:[%s767] sm:$0xf]
        %770 = vrot.lane.b32.xlu0 %v768, 48
        %v771 = vpop.permute.xlu0 %770
        %v772 = vrot.slane %v771, 6
        %vm773 = vcmask 392192
        %v774 = vsel %vm773, %v772, %v771
        %v776 = vmul.f32 %v404, %v774
        %778 = vrot.lane.b32.xlu0 %v776, 80
        %v779 = vpop.permute.xlu0 %778
        %v780 = vrot.slane %v779, 2
        %vm781 = vcmask 654336
        %v782 = vsel %vm781, %v779, %v780
        %v784 = vadd.f32 %v766, %v782
        %s785 = scalar_lea.vmem [#allocation9], 88
        %v786 = vld [vmem:[%s785] sm:$0xf]
        %788 = vrot.lane.b32.xlu0 %v786, 49
        %v789 = vpop.permute.xlu0 %788
        %v790 = vrot.slane %v789, 6
        %vm791 = vcmask 400384
        %v792 = vsel %vm791, %v790, %v789
        %v794 = vmul.f32 %v404, %v792
        %796 = vrot.lane.b32.xlu0 %v794, 79
        %v797 = vpop.permute.xlu0 %796
        %v798 = vrot.slane %v797, 2
        %vm799 = vcmask 646144
        %v800 = vsel %vm799, %v797, %v798
        %v802 = vadd.f32 %v784, %v800
        %s803 = scalar_lea.vmem [#allocation9], 92
        %v804 = vld [vmem:[%s803] sm:$0xf]
        %806 = vrot.lane.b32.xlu0 %v804, 50
        %v807 = vpop.permute.xlu0 %806
        %v808 = vrot.slane %v807, 6
        %vm809 = vcmask 408576
        %v810 = vsel %vm809, %v808, %v807
        %v812 = vmul.f32 %v404, %v810
        %814 = vrot.lane.b32.xlu0 %v812, 78
        %v815 = vpop.permute.xlu0 %814
        %v816 = vrot.slane %v815, 2
        %vm817 = vcmask 637952
        %v818 = vsel %vm817, %v815, %v816
        %v820 = vadd.f32 %v802, %v818
        %s821 = scalar_lea.vmem [#allocation9], 96
        %v822 = vld [vmem:[%s821] sm:$0xf]
        %824 = vrot.lane.b32.xlu0 %v822, 51
        %v825 = vpop.permute.xlu0 %824
        %v826 = vrot.slane %v825, 6
        %v827 = vsel %vm372, %v826, %v825
        %v829 = vmul.f32 %v404, %v827
        %831 = vrot.lane.b32.xlu0 %v829, 77
        %v832 = vpop.permute.xlu0 %831
        %v833 = vrot.slane %v832, 2
        %vm834 = vcmask 629760
        %v835 = vsel %vm834, %v832, %v833
        %v837 = vadd.f32 %v820, %v835
        %s838 = scalar_lea.vmem [#allocation9], 100
        %v839 = vld [vmem:[%s838] sm:$0xf]
        %841 = vrot.lane.b32.xlu0 %v839, 52
        %v842 = vpop.permute.xlu0 %841
        %v843 = vrot.slane %v842, 6
        %vm844 = vcmask 424960
        %v845 = vsel %vm844, %v843, %v842
        %v847 = vmul.f32 %v404, %v845
        %849 = vrot.lane.b32.xlu0 %v847, 76
        %v850 = vpop.permute.xlu0 %849
        %v851 = vrot.slane %v850, 2
        %vm852 = vcmask 621568
        %v853 = vsel %vm852, %v850, %v851
        %v855 = vadd.f32 %v837, %v853
        %s856 = scalar_lea.vmem [#allocation9], 104
        %v857 = vld [vmem:[%s856] sm:$0xf]
        %859 = vrot.lane.b32.xlu0 %v857, 53
        %v860 = vpop.permute.xlu0 %859
        %v861 = vrot.slane %v860, 6
        %vm862 = vcmask 433152
        %v863 = vsel %vm862, %v861, %v860
        %v865 = vmul.f32 %v404, %v863
        %867 = vrot.lane.b32.xlu0 %v865, 75
        %v868 = vpop.permute.xlu0 %867
        %v869 = vrot.slane %v868, 2
        %vm870 = vcmask 613376
        %v871 = vsel %vm870, %v868, %v869
        %v873 = vadd.f32 %v855, %v871
        %s874 = scalar_lea.vmem [#allocation9], 108
        %v875 = vld [vmem:[%s874] sm:$0xf]
        %877 = vrot.lane.b32.xlu0 %v875, 54
        %v878 = vpop.permute.xlu0 %877
        %v879 = vrot.slane %v878, 6
        %vm880 = vcmask 441344
        %v881 = vsel %vm880, %v879, %v878
        %v883 = vmul.f32 %v404, %v881
        %885 = vrot.lane.b32.xlu0 %v883, 74
        %v886 = vpop.permute.xlu0 %885
        %v887 = vrot.slane %v886, 2
        %vm888 = vcmask 605184
        %v889 = vsel %vm888, %v886, %v887
        %v891 = vadd.f32 %v873, %v889
        %s892 = scalar_lea.vmem [#allocation9], 112
        %v893 = vld [vmem:[%s892] sm:$0xf]
        %895 = vrot.lane.b32.xlu0 %v893, 64
        %v896 = vpop.permute.xlu0 %895
        %v897 = vrot.slane %v896, 6
        %vm898 = vcmask 523264
        %v899 = vsel %vm898, %v897, %v896
        %v901 = vmul.f32 %v404, %v899
        %903 = vrot.lane.b32.xlu0 %v901, 64
        %v904 = vpop.permute.xlu0 %903
        %v905 = vrot.slane %v904, 2
        %v906 = vsel %vm898, %v904, %v905
        %v908 = vadd.f32 %v891, %v906
        %s909 = scalar_lea.vmem [#allocation9], 116
        %v910 = vld [vmem:[%s909] sm:$0xf]
        %912 = vrot.lane.b32.xlu0 %v910, 65
        %v913 = vpop.permute.xlu0 %912
        %v914 = vrot.slane %v913, 6
        %vm915 = vcmask 531456
        %v916 = vsel %vm915, %v914, %v913
        %v918 = vmul.f32 %v404, %v916
        %920 = vrot.lane.b32.xlu0 %v918, 63
        %v921 = vpop.permute.xlu0 %920
        %v922 = vrot.slane %v921, 2
        %vm923 = vcmask 515072
        %v924 = vsel %vm923, %v921, %v922
        %v926 = vadd.f32 %v908, %v924
        %s927 = scalar_lea.vmem [#allocation9], 120
        %v928 = vld [vmem:[%s927] sm:$0xf]
        %930 = vrot.lane.b32.xlu0 %v928, 66
        %v931 = vpop.permute.xlu0 %930
        %v932 = vrot.slane %v931, 6
        %vm933 = vcmask 539648
        %v934 = vsel %vm933, %v932, %v931
        %v936 = vmul.f32 %v404, %v934
        %938 = vrot.lane.b32.xlu0 %v936, 62
        %v939 = vpop.permute.xlu0 %938
        %v940 = vrot.slane %v939, 2
        %vm941 = vcmask 506880
        %v942 = vsel %vm941, %v939, %v940
        %v944 = vadd.f32 %v926, %v942
        %s945 = scalar_lea.vmem [#allocation9], 124
        %v946 = vld [vmem:[%s945] sm:$0xf]
        %948 = vrot.lane.b32.xlu0 %v946, 67
        %v949 = vpop.permute.xlu0 %948
        %v950 = vrot.slane %v949, 6
        %vm951 = vcmask 547840
        %v952 = vsel %vm951, %v950, %v949
        %v954 = vmul.f32 %v404, %v952
        %956 = vrot.lane.b32.xlu0 %v954, 61
        %v957 = vpop.permute.xlu0 %956
        %v958 = vrot.slane %v957, 2
        %vm959 = vcmask 498688
        %v960 = vsel %vm959, %v957, %v958
        %v962 = vadd.f32 %v944, %v960
        %s963 = scalar_lea.vmem [#allocation9], 128
        %v964 = vld [vmem:[%s963] sm:$0xf]
        %966 = vrot.lane.b32.xlu0 %v964, 68
        %v967 = vpop.permute.xlu0 %966
        %v968 = vrot.slane %v967, 6
        %vm969 = vcmask 556032
        %v970 = vsel %vm969, %v968, %v967
        %v972 = vmul.f32 %v404, %v970
        %974 = vrot.lane.b32.xlu0 %v972, 60
        %v975 = vpop.permute.xlu0 %974
        %v976 = vrot.slane %v975, 2
        %vm977 = vcmask 490496
        %v978 = vsel %vm977, %v975, %v976
        %v980 = vadd.f32 %v962, %v978
        %s981 = scalar_lea.vmem [#allocation9], 132
        %v982 = vld [vmem:[%s981] sm:$0xf]
        %984 = vrot.lane.b32.xlu0 %v982, 69
        %v985 = vpop.permute.xlu0 %984
        %v986 = vrot.slane %v985, 6
        %vm987 = vcmask 564224
        %v988 = vsel %vm987, %v986, %v985
        %v990 = vmul.f32 %v404, %v988
        %992 = vrot.lane.b32.xlu0 %v990, 59
        %v993 = vpop.permute.xlu0 %992
        %v994 = vrot.slane %v993, 2
        %vm995 = vcmask 482304
        %v996 = vsel %vm995, %v993, %v994
        %v998 = vadd.f32 %v980, %v996
        %s999 = scalar_lea.vmem [#allocation9], 136
        %v1000 = vld [vmem:[%s999] sm:$0xf]
        %1002 = vrot.lane.b32.xlu0 %v1000, 70
        %v1003 = vpop.permute.xlu0 %1002
        %v1004 = vrot.slane %v1003, 6
        %vm1005 = vcmask 572416
        %v1006 = vsel %vm1005, %v1004, %v1003
        %v1008 = vmul.f32 %v404, %v1006
        %1010 = vrot.lane.b32.xlu0 %v1008, 58
        %v1011 = vpop.permute.xlu0 %1010
        %v1012 = vrot.slane %v1011, 2
        %vm1013 = vcmask 474112
        %v1014 = vsel %vm1013, %v1011, %v1012
        %v1016 = vadd.f32 %v998, %v1014
        %s1017 = scalar_lea.vmem [#allocation9], 140
        %v1018 = vld [vmem:[%s1017] sm:$0xf]
        %1020 = vrot.lane.b32.xlu0 %v1018, 80
        %v1021 = vpop.permute.xlu0 %1020
        %v1022 = vrot.slane %v1021, 6
        %v1023 = vsel %vm781, %v1022, %v1021
        %v1025 = vmul.f32 %v404, %v1023
        %1027 = vrot.lane.b32.xlu0 %v1025, 48
        %v1028 = vpop.permute.xlu0 %1027
        %v1029 = vrot.slane %v1028, 2
        %v1030 = vsel %vm773, %v1028, %v1029
        %v1032 = vadd.f32 %v1016, %v1030
        %s1033 = scalar_lea.vmem [#allocation9], 144
        %v1034 = vld [vmem:[%s1033] sm:$0xf]
        %1036 = vrot.lane.b32.xlu0 %v1034, 81
        %v1037 = vpop.permute.xlu0 %1036
        %v1038 = vrot.slane %v1037, 6
        %vm1039 = vcmask 662528
        %v1040 = vsel %vm1039, %v1038, %v1037
        %v1042 = vmul.f32 %v404, %v1040
        %1044 = vrot.lane.b32.xlu0 %v1042, 47
        %v1045 = vpop.permute.xlu0 %1044
        %v1046 = vrot.slane %v1045, 2
        %vm1047 = vcmask 384000
        %v1048 = vsel %vm1047, %v1045, %v1046
        %v1050 = vadd.f32 %v1032, %v1048
        %s1051 = scalar_lea.vmem [#allocation9], 148
        %v1052 = vld [vmem:[%s1051] sm:$0xf]
        %1054 = vrot.lane.b32.xlu0 %v1052, 82
        %v1055 = vpop.permute.xlu0 %1054
        %v1056 = vrot.slane %v1055, 6
        %vm1057 = vcmask 670720
        %v1058 = vsel %vm1057, %v1056, %v1055
        %v1060 = vmul.f32 %v404, %v1058
        %1062 = vrot.lane.b32.xlu0 %v1060, 46
        %v1063 = vpop.permute.xlu0 %1062
        %v1064 = vrot.slane %v1063, 2
        %vm1065 = vcmask 375808
        %v1066 = vsel %vm1065, %v1063, %v1064
        %v1068 = vadd.f32 %v1050, %v1066
        %s1069 = scalar_lea.vmem [#allocation9], 152
        %v1070 = vld [vmem:[%s1069] sm:$0xf]
        %1072 = vrot.lane.b32.xlu0 %v1070, 83
        %v1073 = vpop.permute.xlu0 %1072
        %v1074 = vrot.slane %v1073, 6
        %vm1075 = vcmask 678912
        %v1076 = vsel %vm1075, %v1074, %v1073
        %v1078 = vmul.f32 %v404, %v1076
        %1080 = vrot.lane.b32.xlu0 %v1078, 45
        %v1081 = vpop.permute.xlu0 %1080
        %v1082 = vrot.slane %v1081, 2
        %vm1083 = vcmask 367616
        %v1084 = vsel %vm1083, %v1081, %v1082
        %v1086 = vadd.f32 %v1068, %v1084
        %s1087 = scalar_lea.vmem [#allocation9], 156
        %v1088 = vld [vmem:[%s1087] sm:$0xf]
        %1090 = vrot.lane.b32.xlu0 %v1088, 84
        %v1091 = vpop.permute.xlu0 %1090
        %v1092 = vrot.slane %v1091, 6
        %vm1093 = vcmask 687104
        %v1094 = vsel %vm1093, %v1092, %v1091
        %v1096 = vmul.f32 %v404, %v1094
        %1098 = vrot.lane.b32.xlu0 %v1096, 44
        %v1099 = vpop.permute.xlu0 %1098
        %v1100 = vrot.slane %v1099, 2
        %vm1101 = vcmask 359424
        %v1102 = vsel %vm1101, %v1099, %v1100
        %v1104 = vadd.f32 %v1086, %v1102
        %s1105 = scalar_lea.vmem [#allocation9], 160
        %v1106 = vld [vmem:[%s1105] sm:$0xf]
        %1108 = vrot.lane.b32.xlu0 %v1106, 85
        %v1109 = vpop.permute.xlu0 %1108
        %v1110 = vrot.slane %v1109, 6
        %vm1111 = vcmask 695296
        %v1112 = vsel %vm1111, %v1110, %v1109
        %v1114 = vmul.f32 %v404, %v1112
        %1116 = vrot.lane.b32.xlu0 %v1114, 43
        %v1117 = vpop.permute.xlu0 %1116
        %v1118 = vrot.slane %v1117, 2
        %vm1119 = vcmask 351232
        %v1120 = vsel %vm1119, %v1117, %v1118
        %v1122 = vadd.f32 %v1104, %v1120
        %s1123 = scalar_lea.vmem [#allocation9], 164
        %v1124 = vld [vmem:[%s1123] sm:$0xf]
        %1126 = vrot.lane.b32.xlu0 %v1124, 86
        %v1127 = vpop.permute.xlu0 %1126
        %v1128 = vrot.slane %v1127, 6
        %vm1129 = vcmask 703488
        %v1130 = vsel %vm1129, %v1128, %v1127
        %v1132 = vmul.f32 %v404, %v1130
        %1134 = vrot.lane.b32.xlu0 %v1132, 42
        %v1135 = vpop.permute.xlu0 %1134
        %v1136 = vrot.slane %v1135, 2
        %vm1137 = vcmask 343040
        %v1138 = vsel %vm1137, %v1135, %v1136
        %v1140 = vadd.f32 %v1122, %v1138
        %s1141 = scalar_lea.vmem [#allocation9], 168
        %v1142 = vld [vmem:[%s1141] sm:$0xf]
        %1144 = vrot.lane.b32.xlu0 %v1142, 96
        %v1145 = vpop.permute.xlu0 %1144
        %v1146 = vrot.slane %v1145, 6
        %v1147 = vsel %vm655, %v1146, %v1145
        %v1149 = vmul.f32 %v404, %v1147
        %1151 = vrot.lane.b32.xlu0 %v1149, 32
        %v1152 = vpop.permute.xlu0 %1151
        %v1153 = vrot.slane %v1152, 2
        %v1154 = vsel %vm647, %v1152, %v1153
        %v1156 = vadd.f32 %v1140, %v1154
        %s1157 = scalar_lea.vmem [#allocation9], 172
        %v1158 = vld [vmem:[%s1157] sm:$0xf]
        %1160 = vrot.lane.b32.xlu0 %v1158, 97
        %v1161 = vpop.permute.xlu0 %1160
        %v1162 = vrot.slane %v1161, 6
        %vm1163 = vcmask 793600
        %v1164 = vsel %vm1163, %v1162, %v1161
        %v1166 = vmul.f32 %v404, %v1164
        %1168 = vrot.lane.b32.xlu0 %v1166, 31
        %v1169 = vpop.permute.xlu0 %1168
        %v1170 = vrot.slane %v1169, 2
        %vm1171 = vcmask 252928
        %v1172 = vsel %vm1171, %v1169, %v1170
        %v1174 = vadd.f32 %v1156, %v1172
        %s1175 = scalar_lea.vmem [#allocation9], 176
        %v1176 = vld [vmem:[%s1175] sm:$0xf]
        %1178 = vrot.lane.b32.xlu0 %v1176, 98
        %v1179 = vpop.permute.xlu0 %1178
        %v1180 = vrot.slane %v1179, 6
        %vm1181 = vcmask 801792
        %v1182 = vsel %vm1181, %v1180, %v1179
        %v1184 = vmul.f32 %v404, %v1182
        %1186 = vrot.lane.b32.xlu0 %v1184, 30
        %v1187 = vpop.permute.xlu0 %1186
        %v1188 = vrot.slane %v1187, 2
        %vm1189 = vcmask 244736
        %v1190 = vsel %vm1189, %v1187, %v1188
        %v1192 = vadd.f32 %v1174, %v1190
        %s1193 = scalar_lea.vmem [#allocation9], 180
        %v1194 = vld [vmem:[%s1193] sm:$0xf]
        %1196 = vrot.lane.b32.xlu0 %v1194, 99
        %v1197 = vpop.permute.xlu0 %1196
        %v1198 = vrot.slane %v1197, 6
        %vm1199 = vcmask 809984
        %v1200 = vsel %vm1199, %v1198, %v1197
        %v1202 = vmul.f32 %v404, %v1200
        %1204 = vrot.lane.b32.xlu0 %v1202, 29
        %v1205 = vpop.permute.xlu0 %1204
        %v1206 = vrot.slane %v1205, 2
        %vm1207 = vcmask 236544
        %v1208 = vsel %vm1207, %v1205, %v1206
        %v1210 = vadd.f32 %v1192, %v1208
        %s1211 = scalar_lea.vmem [#allocation9], 184
        %v1212 = vld [vmem:[%s1211] sm:$0xf]
        %1214 = vrot.lane.b32.xlu0 %v1212, 100
        %v1215 = vpop.permute.xlu0 %1214
        %v1216 = vrot.slane %v1215, 6
        %vm1217 = vcmask 818176
        %v1218 = vsel %vm1217, %v1216, %v1215
        %v1220 = vmul.f32 %v404, %v1218
        %1222 = vrot.lane.b32.xlu0 %v1220, 28
        %v1223 = vpop.permute.xlu0 %1222
        %v1224 = vrot.slane %v1223, 2
        %vm1225 = vcmask 228352
        %v1226 = vsel %vm1225, %v1223, %v1224
        %v1228 = vadd.f32 %v1210, %v1226
        %s1229 = scalar_lea.vmem [#allocation9], 188
        %v1230 = vld [vmem:[%s1229] sm:$0xf]
        %1232 = vrot.lane.b32.xlu0 %v1230, 101
        %v1233 = vpop.permute.xlu0 %1232
        %v1234 = vrot.slane %v1233, 6
        %vm1235 = vcmask 826368
        %v1236 = vsel %vm1235, %v1234, %v1233
        %v1238 = vmul.f32 %v404, %v1236
        %1240 = vrot.lane.b32.xlu0 %v1238, 27
        %v1241 = vpop.permute.xlu0 %1240
        %v1242 = vrot.slane %v1241, 2
        %vm1243 = vcmask 220160
        %v1244 = vsel %vm1243, %v1241, %v1242
        %v1246 = vadd.f32 %v1228, %v1244
        %s1247 = scalar_lea.vmem [#allocation9], 192
        %v1248 = vld [vmem:[%s1247] sm:$0xf]
        %1250 = vrot.lane.b32.xlu0 %v1248, 102
        %v1251 = vpop.permute.xlu0 %1250
        %v1252 = vrot.slane %v1251, 6
        %vm1253 = vcmask 834560
        %v1254 = vsel %vm1253, %v1252, %v1251
        %v1256 = vmul.f32 %v404, %v1254
        %1258 = vrot.lane.b32.xlu0 %v1256, 26
        %v1259 = vpop.permute.xlu0 %1258
        %v1260 = vrot.slane %v1259, 2
        %vm1261 = vcmask 211968
        %v1262 = vsel %vm1261, %v1259, %v1260
        %v1264 = vadd.f32 %v1246, %v1262
        %v1266 = vrot.slane %v1264, 7
        %v1267 = vrot.slane %v1266, 2
        %v1269 = vadd.f32 %v1264, %v1267
        %s1270 = sld [smem:[#allocation4]]
        %v1271 = vstv %s1270
        %v1272 = vadd.f32 %v1269, %v1271
        %v1273 = vxor.u32 %v1272, 2147483648
        %v1274 = vmul.f32 %v1273, 1.442695
        %v1275 = vpow.pop %v1274
        %v1276 = vadd.f32 %v1275, 1.0
        %v1277 = vrcp.pop %v1276
        %v1278 = vmul.f32 1.0, %v1277
        %v1280 = vlaneseq
        %v1281 = vshrl.u32 %v1280, 7
        %v1282 = vsub.s32 0, %v1281
        %v1283 = vrot.slane %v1278, %v1282
        %v1284 = vlaneseq
        %v1285 = vshrl.u32 %v1284, 7
        %v1286 = vsub.s32 2, %v1285
        %v1287 = vrot.slane %v1278, %v1286
        %v1290 = vlaneseq
        %v1291 = vshrl.u32 %v1290, 7
        %v1292 = vsub.s32 0, %v1291
        %v1293 = vrot.slane %v1283, %v1292
        %v1294 = vlaneseq
        %v1295 = vshrl.u32 %v1294, 7
        %v1296 = vsub.s32 0, %v1295
        %v1297 = vrot.slane %v1287, %v1296
        %v1298 = vmul.f32 %v316, %v1293
        %v1299 = vmul.f32 %v317, %v1297
        %v1300 = vmul.f32 %v318, %v1293
        %v1301 = vmul.f32 %v319, %v1297
        %1302 = vst [vmem:[%s245] sm:$0xff] %v1298
        %1303 = vst [vmem:[%s245 + $0x8] sm:$0xff] %v1299
        %1304 = vst [vmem:[%s245 + $0x10] sm:$0xff] %v1300
        %1305 = vst [vmem:[%s245 + $0x18] sm:$0xff] %v1301
        %s1306 = sand.u32 %s121, 1
        %s1307 = scalar_lea.sflag [#allocation7], %s1306
        %s1308 = sand.u32 %s121, 1
        %s1309 = smul.addr %s1308, 32
        %s1310 = scalar_lea.vmem [#allocation12], %s1309
        // Predicated region
        $region49: #{tpu_custom_call.1} parent=35 // pred_check
          %p1311 = pneg %p131
        $region50: #{tpu_custom_call.1} parent=35 // pred_check_branch
          %1313 = sbr.rel (%p1311) target = $region52
        $region51: #{tpu_custom_call.1} parent=35 // pred_region
          %s1315 = ssub.s32 512, 512
          %1316 = vsyncadd %s1307, %s1315
          %s1317 = smul.addr %s24, 4
          %s1318 = smul.addr %s1317, 128
          %s1319 = scalar_lea.hbm %s4, %s1318
          %s1320 = sshll.u32 %s1310, 4
          %s1321 = int_to_ptr.vmem [resolvable:$true] %s1320
          %1326 = dma.vmem_to_hbm [thread:$0]  %s1321, 512, %s1319, %s1307, 256, 256, 16
        $region52: #{tpu_custom_call.1} parent=35 // pred_fallthru
          _
      $region36: #{tpu_custom_call.1} parent=5 // pred_fallthru
        _
      %p1327 = scmp.le.s32.totalorder 2, %s19
      // Predicated region
      $region53: #{tpu_custom_call.1} parent=5 // pred_check
        %p1328 = pneg %p1327
      $region54: #{tpu_custom_call.1} parent=5 // pred_check_branch
        %1330 = sbr.rel (%p1328) target = $region56
      $region55: #{tpu_custom_call.1} parent=5 // pred_region
        %s1331 = ssub.s32 %s19, 2
        // Predicated region
        $region57: #{tpu_custom_call.1} parent=55 // pred_check
          %p1332 = pneg %p137
        $region58: #{tpu_custom_call.1} parent=55 // pred_check_branch
          %1334 = sbr.rel (%p1332) target = $region60
        $region59: #{tpu_custom_call.1} parent=55 // pred_region
          %s1335 = sand.u32 %s122, 1
          %s1336 = scalar_lea.sflag [#allocation7], %s1335
          %s1337 = sand.u32 %s122, 1
          %s1338 = smul.addr %s1337, 32
          %s1339 = scalar_lea.vmem [#allocation12], %s1338
          %1340 = dma.done %s1336, 512
        $region60: #{tpu_custom_call.1} parent=55 // pred_fallthru
          _
      $region56: #{tpu_custom_call.1} parent=5 // pred_fallthru
        _
    $region6: #{tpu_custom_call.1} parent=1 // loop_footer
      %s23 = sadd.s32 1, %s19
    $region7: #{tpu_custom_call.1} parent=1 // loop_footer_branch
      %18 = sbr.rel target = $region3
    $region8: #{tpu_custom_call.1} parent=1 // loop_exit
      _
    %1341 = vsyncpa [#allocation6], 1
    %s1342 = scalar_lea.sflag [#allocation6], 1
    %1343 = vsyncpa %s1342, 1
    %1344 = vsyncpa [#allocation10], 1
    %1345 = vsyncpa [#allocation7], 1
    %s1346 = scalar_lea.sflag [#allocation7], 1
    %1347 = vsyncpa %s1346, 1
    %1348 = vsyncpa [#allocation8], 1
    %s1349 = scalar_lea.sflag [#allocation8], 1
    %1350 = vsyncpa %s1349, 1

</llo_original>
